<compile_context>
chip_gen: v5e
topology: v5e:2x2
jax: 0.10.0
libtpu: 0.0.40
codegen_flags: <defaults>
</compile_context>

<pallas_src>
import math
from functools import partial

import jax
import jax.numpy as jnp
from jax import lax
from jax.experimental import pallas as pl
from jax.experimental.pallas import tpu as pltpu

RMS_EPS = float(jnp.finfo(jnp.float32).eps)   # torch nn.RMSNorm(eps=None) default (f32)
INV_SQRT2 = 0.7071067811865476                # exact (erf) GELU, torch nn.GELU default

# MXU operand dtype: bf16 (f32 accumulate) per v6e/v7x feedback; use jnp.float32 for
# bit-closer parity with the PyTorch reference.
MATMUL_DTYPE = jnp.bfloat16

_VMEM = pl.BlockSpec(memory_space=pltpu.MemorySpace.VMEM)


def _rms_norm(x, w):
    # torch RMSNorm: x * rsqrt(mean(x^2) + eps) * weight   (mean over the logical E lanes)
    ms = jnp.mean(x * x, axis=-1, keepdims=True)
    return x * lax.rsqrt(ms + RMS_EPS) * w


def _mdot(a, b):
    """MXU matmul: operands in MATMUL_DTYPE, accumulation in f32."""
    return jnp.dot(a.astype(MATMUL_DTYPE), b.astype(MATMUL_DTYPE),
                   preferred_element_type=jnp.float32)


# ---------------------------------------------------------------------------
# Single fused kernel:
#   RMSNorm+res -> stacked (rep/texp-folded) QKV matmuls -> query projections ->
#   4x per-row heads-as-sequence attention -> residual sums ->
#   2x (RMSNorm -> Linear -> GELU -> Linear -> +residual) FFN branches.
#
# Expanded-space attention (width W = H*E), per row n, head-row i, head-col j,
# head-dim d (hd = E//H):
#   qR[n, j*E + i*hd + d] = q_proj[n, i*hd + d]          (Wq @ rep    folded at init)
#   kE[n, j*E + i*hd + d] = k_proj[n, j*hd + d]          (Wk @ texp   folded at init)
#   vE[n, j*E + i*hd + d] = v_proj[n, j*hd + d]          (Wv @ texp   folded at init)
#   s  = (qR*kE) @ wsegW        -> s[n, j*E+i*hd+d] = scores[n,i,j] (scale in wsegW)
#   m  = lane-roll butterfly max over the H j-blocks (period E, H power of 2)
#   p  = exp(s - m)
#   out = ((p*vE) @ repT) / (p @ repT)                   == softmax_j(scores) @ v
# ---------------------------------------------------------------------------
def block_kernel(xn_ref, xe_ref, adj_ref, p1_ref, p2_ref,
                 wn1h_ref, wn1e_ref, whs_ref, wes_ref,
                 wseg_ref, rept_ref, wn2h_ref, wn2e_ref,
                 w1h_ref, b1h_ref, w2h_ref, b2h_ref,
                 w1e_ref, b1e_ref, w2e_ref, b2e_ref,
                 oh_ref, oe_ref, *, embed_dim, n_head):
    E = embed_dim
    W = n_head * E                 # expanded width; multiple of 128 at these sizes

    xn = xn_ref[...]
    xe = xe_ref[...]
    h = _rms_norm(xn, wn1h_ref[...]) + xn          # rmsn1_h(x_node) + x_node
    e = _rms_norm(xe, wn1e_ref[...]) + xe          # rmsn1_e(x_edge) + x_edge

    # One lane-dense stacked matmul per source; every W-wide slot is already
    # head-expanded (rep/texp folded into the weights at init), so all slices below
    # land on 128-aligned lane boundaries.
    h6 = _mdot(h, whs_ref[...])    # (Nn, 6W): [qR_hh | kE_hh | vE_hh | kE_eh | vE_eh | qR_he]
    e6 = _mdot(e, wes_ref[...])    # (Ne, 6W): [qR_eh | qR_ee | kE_ee | vE_ee | kE_he | vE_he]

    # Query projections of the reference forward, applied in expanded space
    # (valid by associativity: (A @ (x@Wq)) @ rep == A @ (x @ (Wq@rep))).
    qr_hh = _mdot(adj_ref[...], h6[:, 0 * W:1 * W])   # torch.sparse.mm(adj, query)
    qr_eh = _mdot(p2_ref[...], e6[:, 0 * W:1 * W])    # shape_proj_mat_2 @ query
    qr_he = _mdot(p1_ref[...], h6[:, 5 * W:6 * W])    # shape_proj_mat_1 @ query
    qr_ee = e6[:, 1 * W:2 * W]                        # sa_ee_e: no query projection

    def attn(qr, ke, ve):
        s = _mdot(qr * ke, wseg_ref[...])             # (N, W): per-(i,j) segment sums * scale
        # Max over the H key-head blocks via a circular lane-roll butterfly (XLU slot).
        m = s
        shift = E
        while shift < W:
            m = jnp.maximum(m, pltpu.roll(m, shift, axis=1))
            shift *= 2
        p = jnp.exp(s - m)
        den = _mdot(p, rept_ref[...])                 # (N, E): sum_j exp(s_ij - m_i)
        acc = _mdot(p * ve, rept_ref[...])            # (N, E): sum_j exp(...) * v_jd
        return acc * pl.reciprocal(den, approx=False) # exact recip (numerical parity)

    # Residual sums (sa_hh_h + sa_eh_h + h, sa_ee_e + sa_he_e + e).
    xh_mid = (attn(qr_hh, h6[:, 1 * W:2 * W], h6[:, 2 * W:3 * W])
              + attn(qr_eh, h6[:, 3 * W:4 * W], h6[:, 4 * W:5 * W]) + h)
    xe_mid = (attn(qr_ee, e6[:, 2 * W:3 * W], e6[:, 3 * W:4 * W])
              + attn(qr_he, e6[:, 4 * W:5 * W], e6[:, 5 * W:6 * W]) + e)

    # FFN branches fused into the same kernel (no HBM round-trip of xh_mid/xe_mid).
    def ffn(x, wn, w1_ref, b1_ref, w2_ref, b2_ref):
        xnorm = _rms_norm(x, wn)
        hid = _mdot(xnorm, w1_ref[...]) + b1_ref[...]
        hid = 0.5 * hid * (1.0 + lax.erf(hid * INV_SQRT2))   # nn.GELU(approximate='none')
        return _mdot(hid, w2_ref[...]) + b2_ref[...] + x

    # Single full-width (lane-dense) store per output.
    oh_ref[...] = ffn(xh_mid, wn2h_ref[...], w1h_ref, b1h_ref,
                      w2h_ref, b2h_ref).astype(oh_ref.dtype)
    oe_ref[...] = ffn(xe_mid, wn2e_ref[...], w1e_ref, b1e_ref,
                      w2e_ref, b2e_ref).astype(oe_ref.dtype)


# ---------------------------------------------------------------------------
# Deterministic parameter initialization (shapes from the reference __init__).
# Linear weights are drawn with the torch default (uniform +-1/sqrt(fan_in)), stored
# pre-transposed (in, out), and the head-expansion matrices + score scale are folded
# in at init time (a checkpoint would be transformed the same way).
# ---------------------------------------------------------------------------
def init_params(key, embed_dim, num_nodes, num_edges, n_head):
    E, H = embed_dim, n_head
    assert E % H == 0 and (H & (H - 1)) == 0, "needs power-of-2 heads dividing E"
    hd = E // H
    W = H * E
    f32 = jnp.float32

    def lin_w(k, in_dim, out_dim):          # pre-transposed Linear weight: y = x @ W
        b = 1.0 / math.sqrt(in_dim)
        return jax.random.uniform(k, (in_dim, out_dim), f32, -b, b)

    def xavier(k, shape):
        b = math.sqrt(6.0 / (shape[0] + shape[1]))
        return jax.random.uniform(k, shape, f32, -b, b)

    idx = jnp.arange(E)
    # rep[c, j*E+c'] = delta(c,c')             : replicate q across the H head-rows
    rep = jnp.tile(jnp.eye(E, dtype=f32), (1, H))                               # (E, W)
    # texp[a, j*E+b] = 1 iff a//hd==j and a%hd==b%hd : expose key-head j per block
    texp = jnp.concatenate(
        [(((idx[:, None] // hd) == j) &
          ((idx[:, None] % hd) == (idx[None, :] % hd))).astype(f32)
         for j in range(H)], axis=1)                                            # (E, W)
    idw = jnp.arange(W)
    # per-(i,j) contiguous hd-segment sum, with the 1/sqrt(hd) SDPA scale baked in
    wsegW = (((idw[:, None] // hd) == (idw[None, :] // hd)).astype(f32)
             / math.sqrt(hd))                                                   # (W, W)
    repT = rep.T                                                                # (W, E)

    keys = iter(jax.random.split(key, 32))
    p = {}
    for name in ("rmsn1_h", "rmsn1_e", "rmsn2_h", "rmsn2_e"):   # torch RMSNorm weight = ones
        p[name] = jnp.ones((1, E), f32)

    def slot(expand):        # one folded (E, W) projection slot
        return lin_w(next(keys), E, E) @ expand

    # h-source stack: [q_hh, k_hh, v_hh, k_eh, v_eh, q_he]
    p["wh_stack"] = jnp.concatenate(
        [slot(rep), slot(texp), slot(texp), slot(texp), slot(texp), slot(rep)],
        axis=1).astype(MATMUL_DTYPE)                                            # (E, 6W)
    # e-source stack: [q_eh, q_ee, k_ee, v_ee, k_he, v_he]
    p["we_stack"] = jnp.concatenate(
        [slot(rep), slot(rep), slot(texp), slot(texp), slot(texp), slot(texp)],
        axis=1).astype(MATMUL_DTYPE)                                            # (E, 6W)

    p["proj1_he"] = xavier(next(keys), (num_nodes, num_edges)).astype(MATMUL_DTYPE)
    p["proj2_eh"] = xavier(next(keys), (num_nodes, num_edges)).astype(MATMUL_DTYPE)
    p["wsegW"] = wsegW.astype(MATMUL_DTYPE)
    p["repT"] = repT.astype(MATMUL_DTYPE)

    for name in ("ffwd_h", "ffwd_e"):       # Linear(E,4E) + GELU + Linear(4E,E)
        w1 = lin_w(next(keys), E, 4 * E).astype(MATMUL_DTYPE)
        b1 = jax.random.uniform(next(keys), (1, 4 * E), f32,
                                -1.0 / math.sqrt(E), 1.0 / math.sqrt(E))
        w2 = lin_w(next(keys), 4 * E, E).astype(MATMUL_DTYPE)
        b2 = jax.random.uniform(next(keys), (1, E), f32,
                                -1.0 / math.sqrt(4 * E), 1.0 / math.sqrt(4 * E))
        p[name] = (w1, b1, w2, b2)
    return p


# ---------------------------------------------------------------------------
# Block forward: ONE pallas_call for the whole block.
# ---------------------------------------------------------------------------
def block_forward(params, x_node, x_edge, adj, num_heads):
    n_n, E = x_node.shape
    n_e, _ = x_edge.shape
    # TODO(synk): for real graph sizes add a row-tiled "parallel" grid (v7x megacore /
    # VMEM headroom) and input_output_aliases when Blocks are stacked under jit.
    return pl.pallas_call(
        partial(block_kernel, embed_dim=E, n_head=num_heads),
        out_shape=(jax.ShapeDtypeStruct((n_n, E), x_node.dtype),
                   jax.ShapeDtypeStruct((n_e, E), x_edge.dtype)),
        in_specs=[_VMEM] * 21,
        out_specs=(_VMEM, _VMEM),
    )(x_node, x_edge, adj, params["proj1_he"], params["proj2_eh"],
      params["rmsn1_h"], params["rmsn1_e"], params["wh_stack"], params["we_stack"],
      params["wsegW"], params["repT"], params["rmsn2_h"], params["rmsn2_e"],
      *params["ffwd_h"], *params["ffwd_e"])


if __name__ == "__main__":
    embed_dim = 32
    num_heads = 4
    num_nodes = 16
    num_edges = 16   # must equal num_nodes (constraint of the reference he-attention)

    key = jax.random.PRNGKey(0)
    k_node, k_edge, k_adj, k_par = jax.random.split(key, 4)
    x_node = jax.random.normal(k_node, (num_nodes, embed_dim), jnp.float32)
    x_edge = jax.random.normal(k_edge, (num_edges, embed_dim), jnp.float32)
    # dense 0/1 stand-in for the sparse adjacency used by torch.sparse.mm
    adj = (jax.random.uniform(k_adj, (num_nodes, num_nodes)) < 0.3).astype(jnp.float32)

    params = init_params(k_par, embed_dim, num_nodes, num_edges, num_heads)

    x_h, x_e = block_forward(params, x_node, x_edge, adj, num_heads)
    jax.block_until_ready((x_h, x_e))
    assert x_h.shape == (num_nodes, embed_dim) and x_e.shape == (num_edges, embed_dim)
    assert bool(jnp.all(jnp.isfinite(x_h))) and bool(jnp.all(jnp.isfinite(x_e)))
    print("KERNEL_OK")
</pallas_src>

<mosaic_0001>
module attributes {stable_mosaic.version = 11 : i64} {
  func.func @block_kernel(%arg0: memref<16x32xf32, #tpu.memory_space<vmem>>, %arg1: memref<16x32xf32, #tpu.memory_space<vmem>>, %arg2: memref<16x16xf32, #tpu.memory_space<vmem>>, %arg3: memref<16x16xbf16, #tpu.memory_space<vmem>>, %arg4: memref<16x16xbf16, #tpu.memory_space<vmem>>, %arg5: memref<1x32xf32, #tpu.memory_space<vmem>>, %arg6: memref<1x32xf32, #tpu.memory_space<vmem>>, %arg7: memref<32x768xbf16, #tpu.memory_space<vmem>>, %arg8: memref<32x768xbf16, #tpu.memory_space<vmem>>, %arg9: memref<128x128xbf16, #tpu.memory_space<vmem>>, %arg10: memref<128x32xbf16, #tpu.memory_space<vmem>>, %arg11: memref<1x32xf32, #tpu.memory_space<vmem>>, %arg12: memref<1x32xf32, #tpu.memory_space<vmem>>, %arg13: memref<32x128xbf16, #tpu.memory_space<vmem>>, %arg14: memref<1x128xf32, #tpu.memory_space<vmem>>, %arg15: memref<128x32xbf16, #tpu.memory_space<vmem>>, %arg16: memref<1x32xf32, #tpu.memory_space<vmem>>, %arg17: memref<32x128xbf16, #tpu.memory_space<vmem>>, %arg18: memref<1x128xf32, #tpu.memory_space<vmem>>, %arg19: memref<128x32xbf16, #tpu.memory_space<vmem>>, %arg20: memref<1x32xf32, #tpu.memory_space<vmem>>, %arg21: memref<16x32xf32, #tpu.memory_space<vmem>>, %arg22: memref<16x32xf32, #tpu.memory_space<vmem>>) attributes {dimension_semantics = [], scalar_prefetch = 0 : i64, scratch_operands = 0 : i64, tpu.core_type = #tpu.core_type<tc>} {
    %c0 = arith.constant 0 : index
    %c0_0 = arith.constant 0 : index
    %0 = vector.load %arg0[%c0, %c0_0] : memref<16x32xf32, #tpu.memory_space<vmem>>, vector<16x32xf32>
    %c0_1 = arith.constant 0 : index
    %c0_2 = arith.constant 0 : index
    %1 = vector.load %arg1[%c0_1, %c0_2] : memref<16x32xf32, #tpu.memory_space<vmem>>, vector<16x32xf32>
    %c0_3 = arith.constant 0 : index
    %c0_4 = arith.constant 0 : index
    %2 = vector.load %arg5[%c0_3, %c0_4] : memref<1x32xf32, #tpu.memory_space<vmem>>, vector<1x32xf32>
    %3 = arith.mulf %0, %0 : vector<16x32xf32>
    %cst = arith.constant dense<0.000000e+00> : vector<16xf32>
    %4 = vector.multi_reduction <add>, %3, %cst [1] : vector<16x32xf32> to vector<16xf32>
    %5 = vector.shape_cast %4 : vector<16xf32> to vector<16x1xf32>
    %cst_5 = arith.constant 3.200000e+01 : f32
    %6 = vector.broadcast %cst_5 : f32 to vector<16x1xf32>
    %7 = arith.divf %5, %6 : vector<16x1xf32>
    %cst_6 = arith.constant 1.1920929E-7 : f32
    %8 = vector.broadcast %cst_6 : f32 to vector<16x1xf32>
    %9 = arith.addf %7, %8 : vector<16x1xf32>
    %10 = math.rsqrt %9 : vector<16x1xf32>
    %11 = vector.broadcast %10 : vector<16x1xf32> to vector<16x32xf32>
    %12 = arith.mulf %0, %11 : vector<16x32xf32>
    %13 = vector.broadcast %2 : vector<1x32xf32> to vector<16x32xf32>
    %14 = arith.mulf %12, %13 : vector<16x32xf32>
    %15 = arith.addf %14, %0 : vector<16x32xf32>
    %c0_7 = arith.constant 0 : index
    %c0_8 = arith.constant 0 : index
    %16 = vector.load %arg6[%c0_7, %c0_8] : memref<1x32xf32, #tpu.memory_space<vmem>>, vector<1x32xf32>
    %17 = arith.mulf %1, %1 : vector<16x32xf32>
    %cst_9 = arith.constant dense<0.000000e+00> : vector<16xf32>
    %18 = vector.multi_reduction <add>, %17, %cst_9 [1] : vector<16x32xf32> to vector<16xf32>
    %19 = vector.shape_cast %18 : vector<16xf32> to vector<16x1xf32>
    %cst_10 = arith.constant 3.200000e+01 : f32
    %20 = vector.broadcast %cst_10 : f32 to vector<16x1xf32>
    %21 = arith.divf %19, %20 : vector<16x1xf32>
    %cst_11 = arith.constant 1.1920929E-7 : f32
    %22 = vector.broadcast %cst_11 : f32 to vector<16x1xf32>
    %23 = arith.addf %21, %22 : vector<16x1xf32>
    %24 = math.rsqrt %23 : vector<16x1xf32>
    %25 = vector.broadcast %24 : vector<16x1xf32> to vector<16x32xf32>
    %26 = arith.mulf %1, %25 : vector<16x32xf32>
    %27 = vector.broadcast %16 : vector<1x32xf32> to vector<16x32xf32>
    %28 = arith.mulf %26, %27 : vector<16x32xf32>
    %29 = arith.addf %28, %1 : vector<16x32xf32>
    %c0_12 = arith.constant 0 : index
    %c0_13 = arith.constant 0 : index
    %30 = vector.load %arg7[%c0_12, %c0_13] : memref<32x768xbf16, #tpu.memory_space<vmem>>, vector<32x768xbf16>
    %31 = arith.truncf %15 : vector<16x32xf32> to vector<16x32xbf16>
    %cst_14 = arith.constant dense<0.000000e+00> : vector<16x768xf32>
    %32 = tpu.matmul %31, %30, %cst_14 {dimension_numbers = #tpu.dot_dimension_numbers<[1], [0], [0], [1], [0, 0, 1, 1], [], []>} : vector<16x32xbf16>, vector<32x768xbf16>, vector<16x768xf32> -> vector<16x768xf32>
    %c0_15 = arith.constant 0 : index
    %c0_16 = arith.constant 0 : index
    %33 = vector.load %arg8[%c0_15, %c0_16] : memref<32x768xbf16, #tpu.memory_space<vmem>>, vector<32x768xbf16>
    %34 = arith.truncf %29 : vector<16x32xf32> to vector<16x32xbf16>
    %cst_17 = arith.constant dense<0.000000e+00> : vector<16x768xf32>
    %35 = tpu.matmul %34, %33, %cst_17 {dimension_numbers = #tpu.dot_dimension_numbers<[1], [0], [0], [1], [0, 0, 1, 1], [], []>} : vector<16x32xbf16>, vector<32x768xbf16>, vector<16x768xf32> -> vector<16x768xf32>
    %c0_18 = arith.constant 0 : index
    %c0_19 = arith.constant 0 : index
    %36 = vector.load %arg2[%c0_18, %c0_19] : memref<16x16xf32, #tpu.memory_space<vmem>>, vector<16x16xf32>
    %37 = vector.extract_strided_slice %32 {offsets = [0, 0], sizes = [16, 128], strides = [1, 1]} : vector<16x768xf32> to vector<16x128xf32>
    %38 = arith.truncf %36 : vector<16x16xf32> to vector<16x16xbf16>
    %39 = arith.truncf %37 : vector<16x128xf32> to vector<16x128xbf16>
    %cst_20 = arith.constant dense<0.000000e+00> : vector<16x128xf32>
    %40 = tpu.matmul %38, %39, %cst_20 {dimension_numbers = #tpu.dot_dimension_numbers<[1], [0], [0], [1], [0, 0, 1, 1], [], []>} : vector<16x16xbf16>, vector<16x128xbf16>, vector<16x128xf32> -> vector<16x128xf32>
    %c0_21 = arith.constant 0 : index
    %c0_22 = arith.constant 0 : index
    %41 = vector.load %arg4[%c0_21, %c0_22] : memref<16x16xbf16, #tpu.memory_space<vmem>>, vector<16x16xbf16>
    %42 = vector.extract_strided_slice %35 {offsets = [0, 0], sizes = [16, 128], strides = [1, 1]} : vector<16x768xf32> to vector<16x128xf32>
    %43 = arith.truncf %42 : vector<16x128xf32> to vector<16x128xbf16>
    %cst_23 = arith.constant dense<0.000000e+00> : vector<16x128xf32>
    %44 = tpu.matmul %41, %43, %cst_23 {dimension_numbers = #tpu.dot_dimension_numbers<[1], [0], [0], [1], [0, 0, 1, 1], [], []>} : vector<16x16xbf16>, vector<16x128xbf16>, vector<16x128xf32> -> vector<16x128xf32>
    %c0_24 = arith.constant 0 : index
    %c0_25 = arith.constant 0 : index
    %45 = vector.load %arg3[%c0_24, %c0_25] : memref<16x16xbf16, #tpu.memory_space<vmem>>, vector<16x16xbf16>
    %46 = vector.extract_strided_slice %32 {offsets = [0, 640], sizes = [16, 128], strides = [1, 1]} : vector<16x768xf32> to vector<16x128xf32>
    %47 = arith.truncf %46 : vector<16x128xf32> to vector<16x128xbf16>
    %cst_26 = arith.constant dense<0.000000e+00> : vector<16x128xf32>
    %48 = tpu.matmul %45, %47, %cst_26 {dimension_numbers = #tpu.dot_dimension_numbers<[1], [0], [0], [1], [0, 0, 1, 1], [], []>} : vector<16x16xbf16>, vector<16x128xbf16>, vector<16x128xf32> -> vector<16x128xf32>
    %49 = vector.extract_strided_slice %35 {offsets = [0, 128], sizes = [16, 128], strides = [1, 1]} : vector<16x768xf32> to vector<16x128xf32>
    %50 = vector.extract_strided_slice %32 {offsets = [0, 128], sizes = [16, 128], strides = [1, 1]} : vector<16x768xf32> to vector<16x128xf32>
    %51 = vector.extract_strided_slice %32 {offsets = [0, 256], sizes = [16, 128], strides = [1, 1]} : vector<16x768xf32> to vector<16x128xf32>
    %52 = arith.mulf %40, %50 : vector<16x128xf32>
    %c0_27 = arith.constant 0 : index
    %c0_28 = arith.constant 0 : index
    %53 = vector.load %arg9[%c0_27, %c0_28] : memref<128x128xbf16, #tpu.memory_space<vmem>>, vector<128x128xbf16>
    %54 = arith.truncf %52 : vector<16x128xf32> to vector<16x128xbf16>
    %cst_29 = arith.constant dense<0.000000e+00> : vector<16x128xf32>
    %55 = tpu.matmul %54, %53, %cst_29 {dimension_numbers = #tpu.dot_dimension_numbers<[1], [0], [0], [1], [0, 0, 1, 1], [], []>} : vector<16x128xbf16>, vector<128x128xbf16>, vector<16x128xf32> -> vector<16x128xf32>
    %c32_i32 = arith.constant 32 : i32
    %56 = tpu.dynamic_rotate %55 by %c32_i32 dim 1 : vector<16x128xf32>, i32 -> vector<16x128xf32>
    %57 = arith.maximumf %55, %56 : vector<16x128xf32>
    %c64_i32 = arith.constant 64 : i32
    %58 = tpu.dynamic_rotate %57 by %c64_i32 dim 1 : vector<16x128xf32>, i32 -> vector<16x128xf32>
    %59 = arith.maximumf %57, %58 : vector<16x128xf32>
    %60 = arith.subf %55, %59 : vector<16x128xf32>
    %61 = math.exp %60 : vector<16x128xf32>
    %c0_30 = arith.constant 0 : index
    %c0_31 = arith.constant 0 : index
    %62 = vector.load %arg10[%c0_30, %c0_31] : memref<128x32xbf16, #tpu.memory_space<vmem>>, vector<128x32xbf16>
    %63 = arith.truncf %61 : vector<16x128xf32> to vector<16x128xbf16>
    %cst_32 = arith.constant dense<0.000000e+00> : vector<16x32xf32>
    %64 = tpu.matmul %63, %62, %cst_32 {dimension_numbers = #tpu.dot_dimension_numbers<[1], [0], [0], [1], [0, 0, 1, 1], [], []>} : vector<16x128xbf16>, vector<128x32xbf16>, vector<16x32xf32> -> vector<16x32xf32>
    %65 = arith.mulf %61, %51 : vector<16x128xf32>
    %c0_33 = arith.constant 0 : index
    %c0_34 = arith.constant 0 : index
    %66 = vector.load %arg10[%c0_33, %c0_34] : memref<128x32xbf16, #tpu.memory_space<vmem>>, vector<128x32xbf16>
    %67 = arith.truncf %65 : vector<16x128xf32> to vector<16x128xbf16>
    %cst_35 = arith.constant dense<0.000000e+00> : vector<16x32xf32>
    %68 = tpu.matmul %67, %66, %cst_35 {dimension_numbers = #tpu.dot_dimension_numbers<[1], [0], [0], [1], [0, 0, 1, 1], [], []>} : vector<16x128xbf16>, vector<128x32xbf16>, vector<16x32xf32> -> vector<16x32xf32>
    %69 = tpu.reciprocal %64 : vector<16x32xf32> -> vector<16x32xf32>
    %70 = arith.mulf %68, %69 : vector<16x32xf32>
    %71 = vector.extract_strided_slice %32 {offsets = [0, 384], sizes = [16, 128], strides = [1, 1]} : vector<16x768xf32> to vector<16x128xf32>
    %72 = vector.extract_strided_slice %32 {offsets = [0, 512], sizes = [16, 128], strides = [1, 1]} : vector<16x768xf32> to vector<16x128xf32>
    %73 = arith.mulf %44, %71 : vector<16x128xf32>
    %c0_36 = arith.constant 0 : index
    %c0_37 = arith.constant 0 : index
    %74 = vector.load %arg9[%c0_36, %c0_37] : memref<128x128xbf16, #tpu.memory_space<vmem>>, vector<128x128xbf16>
    %75 = arith.truncf %73 : vector<16x128xf32> to vector<16x128xbf16>
    %cst_38 = arith.constant dense<0.000000e+00> : vector<16x128xf32>
    %76 = tpu.matmul %75, %74, %cst_38 {dimension_numbers = #tpu.dot_dimension_numbers<[1], [0], [0], [1], [0, 0, 1, 1], [], []>} : vector<16x128xbf16>, vector<128x128xbf16>, vector<16x128xf32> -> vector<16x128xf32>
    %c32_i32_39 = arith.constant 32 : i32
    %77 = tpu.dynamic_rotate %76 by %c32_i32_39 dim 1 : vector<16x128xf32>, i32 -> vector<16x128xf32>
    %78 = arith.maximumf %76, %77 : vector<16x128xf32>
    %c64_i32_40 = arith.constant 64 : i32
    %79 = tpu.dynamic_rotate %78 by %c64_i32_40 dim 1 : vector<16x128xf32>, i32 -> vector<16x128xf32>
    %80 = arith.maximumf %78, %79 : vector<16x128xf32>
    %81 = arith.subf %76, %80 : vector<16x128xf32>
    %82 = math.exp %81 : vector<16x128xf32>
    %c0_41 = arith.constant 0 : index
    %c0_42 = arith.constant 0 : index
    %83 = vector.load %arg10[%c0_41, %c0_42] : memref<128x32xbf16, #tpu.memory_space<vmem>>, vector<128x32xbf16>
    %84 = arith.truncf %82 : vector<16x128xf32> to vector<16x128xbf16>
    %cst_43 = arith.constant dense<0.000000e+00> : vector<16x32xf32>
    %85 = tpu.matmul %84, %83, %cst_43 {dimension_numbers = #tpu.dot_dimension_numbers<[1], [0], [0], [1], [0, 0, 1, 1], [], []>} : vector<16x128xbf16>, vector<128x32xbf16>, vector<16x32xf32> -> vector<16x32xf32>
    %86 = arith.mulf %82, %72 : vector<16x128xf32>
    %c0_44 = arith.constant 0 : index
    %c0_45 = arith.constant 0 : index
    %87 = vector.load %arg10[%c0_44, %c0_45] : memref<128x32xbf16, #tpu.memory_space<vmem>>, vector<128x32xbf16>
    %88 = arith.truncf %86 : vector<16x128xf32> to vector<16x128xbf16>
    %cst_46 = arith.constant dense<0.000000e+00> : vector<16x32xf32>
    %89 = tpu.matmul %88, %87, %cst_46 {dimension_numbers = #tpu.dot_dimension_numbers<[1], [0], [0], [1], [0, 0, 1, 1], [], []>} : vector<16x128xbf16>, vector<128x32xbf16>, vector<16x32xf32> -> vector<16x32xf32>
    %90 = tpu.reciprocal %85 : vector<16x32xf32> -> vector<16x32xf32>
    %91 = arith.mulf %89, %90 : vector<16x32xf32>
    %92 = arith.addf %70, %91 : vector<16x32xf32>
    %93 = arith.addf %92, %15 : vector<16x32xf32>
    %94 = vector.extract_strided_slice %35 {offsets = [0, 256], sizes = [16, 128], strides = [1, 1]} : vector<16x768xf32> to vector<16x128xf32>
    %95 = vector.extract_strided_slice %35 {offsets = [0, 384], sizes = [16, 128], strides = [1, 1]} : vector<16x768xf32> to vector<16x128xf32>
    %96 = arith.mulf %49, %94 : vector<16x128xf32>
    %c0_47 = arith.constant 0 : index
    %c0_48 = arith.constant 0 : index
    %97 = vector.load %arg9[%c0_47, %c0_48] : memref<128x128xbf16, #tpu.memory_space<vmem>>, vector<128x128xbf16>
    %98 = arith.truncf %96 : vector<16x128xf32> to vector<16x128xbf16>
    %cst_49 = arith.constant dense<0.000000e+00> : vector<16x128xf32>
    %99 = tpu.matmul %98, %97, %cst_49 {dimension_numbers = #tpu.dot_dimension_numbers<[1], [0], [0], [1], [0, 0, 1, 1], [], []>} : vector<16x128xbf16>, vector<128x128xbf16>, vector<16x128xf32> -> vector<16x128xf32>
    %c32_i32_50 = arith.constant 32 : i32
    %100 = tpu.dynamic_rotate %99 by %c32_i32_50 dim 1 : vector<16x128xf32>, i32 -> vector<16x128xf32>
    %101 = arith.maximumf %99, %100 : vector<16x128xf32>
    %c64_i32_51 = arith.constant 64 : i32
    %102 = tpu.dynamic_rotate %101 by %c64_i32_51 dim 1 : vector<16x128xf32>, i32 -> vector<16x128xf32>
    %103 = arith.maximumf %101, %102 : vector<16x128xf32>
    %104 = arith.subf %99, %103 : vector<16x128xf32>
    %105 = math.exp %104 : vector<16x128xf32>
    %c0_52 = arith.constant 0 : index
    %c0_53 = arith.constant 0 : index
    %106 = vector.load %arg10[%c0_52, %c0_53] : memref<128x32xbf16, #tpu.memory_space<vmem>>, vector<128x32xbf16>
    %107 = arith.truncf %105 : vector<16x128xf32> to vector<16x128xbf16>
    %cst_54 = arith.constant dense<0.000000e+00> : vector<16x32xf32>
    %108 = tpu.matmul %107, %106, %cst_54 {dimension_numbers = #tpu.dot_dimension_numbers<[1], [0], [0], [1], [0, 0, 1, 1], [], []>} : vector<16x128xbf16>, vector<128x32xbf16>, vector<16x32xf32> -> vector<16x32xf32>
    %109 = arith.mulf %105, %95 : vector<16x128xf32>
    %c0_55 = arith.constant 0 : index
    %c0_56 = arith.constant 0 : index
    %110 = vector.load %arg10[%c0_55, %c0_56] : memref<128x32xbf16, #tpu.memory_space<vmem>>, vector<128x32xbf16>
    %111 = arith.truncf %109 : vector<16x128xf32> to vector<16x128xbf16>
    %cst_57 = arith.constant dense<0.000000e+00> : vector<16x32xf32>
    %112 = tpu.matmul %111, %110, %cst_57 {dimension_numbers = #tpu.dot_dimension_numbers<[1], [0], [0], [1], [0, 0, 1, 1], [], []>} : vector<16x128xbf16>, vector<128x32xbf16>, vector<16x32xf32> -> vector<16x32xf32>
    %113 = tpu.reciprocal %108 : vector<16x32xf32> -> vector<16x32xf32>
    %114 = arith.mulf %112, %113 : vector<16x32xf32>
    %115 = vector.extract_strided_slice %35 {offsets = [0, 512], sizes = [16, 128], strides = [1, 1]} : vector<16x768xf32> to vector<16x128xf32>
    %116 = vector.extract_strided_slice %35 {offsets = [0, 640], sizes = [16, 128], strides = [1, 1]} : vector<16x768xf32> to vector<16x128xf32>
    %117 = arith.mulf %48, %115 : vector<16x128xf32>
    %c0_58 = arith.constant 0 : index
    %c0_59 = arith.constant 0 : index
    %118 = vector.load %arg9[%c0_58, %c0_59] : memref<128x128xbf16, #tpu.memory_space<vmem>>, vector<128x128xbf16>
    %119 = arith.truncf %117 : vector<16x128xf32> to vector<16x128xbf16>
    %cst_60 = arith.constant dense<0.000000e+00> : vector<16x128xf32>
    %120 = tpu.matmul %119, %118, %cst_60 {dimension_numbers = #tpu.dot_dimension_numbers<[1], [0], [0], [1], [0, 0, 1, 1], [], []>} : vector<16x128xbf16>, vector<128x128xbf16>, vector<16x128xf32> -> vector<16x128xf32>
    %c32_i32_61 = arith.constant 32 : i32
    %121 = tpu.dynamic_rotate %120 by %c32_i32_61 dim 1 : vector<16x128xf32>, i32 -> vector<16x128xf32>
    %122 = arith.maximumf %120, %121 : vector<16x128xf32>
    %c64_i32_62 = arith.constant 64 : i32
    %123 = tpu.dynamic_rotate %122 by %c64_i32_62 dim 1 : vector<16x128xf32>, i32 -> vector<16x128xf32>
    %124 = arith.maximumf %122, %123 : vector<16x128xf32>
    %125 = arith.subf %120, %124 : vector<16x128xf32>
    %126 = math.exp %125 : vector<16x128xf32>
    %c0_63 = arith.constant 0 : index
    %c0_64 = arith.constant 0 : index
    %127 = vector.load %arg10[%c0_63, %c0_64] : memref<128x32xbf16, #tpu.memory_space<vmem>>, vector<128x32xbf16>
    %128 = arith.truncf %126 : vector<16x128xf32> to vector<16x128xbf16>
    %cst_65 = arith.constant dense<0.000000e+00> : vector<16x32xf32>
    %129 = tpu.matmul %128, %127, %cst_65 {dimension_numbers = #tpu.dot_dimension_numbers<[1], [0], [0], [1], [0, 0, 1, 1], [], []>} : vector<16x128xbf16>, vector<128x32xbf16>, vector<16x32xf32> -> vector<16x32xf32>
    %130 = arith.mulf %126, %116 : vector<16x128xf32>
    %c0_66 = arith.constant 0 : index
    %c0_67 = arith.constant 0 : index
    %131 = vector.load %arg10[%c0_66, %c0_67] : memref<128x32xbf16, #tpu.memory_space<vmem>>, vector<128x32xbf16>
    %132 = arith.truncf %130 : vector<16x128xf32> to vector<16x128xbf16>
    %cst_68 = arith.constant dense<0.000000e+00> : vector<16x32xf32>
    %133 = tpu.matmul %132, %131, %cst_68 {dimension_numbers = #tpu.dot_dimension_numbers<[1], [0], [0], [1], [0, 0, 1, 1], [], []>} : vector<16x128xbf16>, vector<128x32xbf16>, vector<16x32xf32> -> vector<16x32xf32>
    %134 = tpu.reciprocal %129 : vector<16x32xf32> -> vector<16x32xf32>
    %135 = arith.mulf %133, %134 : vector<16x32xf32>
    %136 = arith.addf %114, %135 : vector<16x32xf32>
    %137 = arith.addf %136, %29 : vector<16x32xf32>
    %c0_69 = arith.constant 0 : index
    %c0_70 = arith.constant 0 : index
    %138 = vector.load %arg11[%c0_69, %c0_70] : memref<1x32xf32, #tpu.memory_space<vmem>>, vector<1x32xf32>
    %139 = arith.mulf %93, %93 : vector<16x32xf32>
    %cst_71 = arith.constant dense<0.000000e+00> : vector<16xf32>
    %140 = vector.multi_reduction <add>, %139, %cst_71 [1] : vector<16x32xf32> to vector<16xf32>
    %141 = vector.shape_cast %140 : vector<16xf32> to vector<16x1xf32>
    %cst_72 = arith.constant 3.200000e+01 : f32
    %142 = vector.broadcast %cst_72 : f32 to vector<16x1xf32>
    %143 = arith.divf %141, %142 : vector<16x1xf32>
    %cst_73 = arith.constant 1.1920929E-7 : f32
    %144 = vector.broadcast %cst_73 : f32 to vector<16x1xf32>
    %145 = arith.addf %143, %144 : vector<16x1xf32>
    %146 = math.rsqrt %145 : vector<16x1xf32>
    %147 = vector.broadcast %146 : vector<16x1xf32> to vector<16x32xf32>
    %148 = arith.mulf %93, %147 : vector<16x32xf32>
    %149 = vector.broadcast %138 : vector<1x32xf32> to vector<16x32xf32>
    %150 = arith.mulf %148, %149 : vector<16x32xf32>
    %c0_74 = arith.constant 0 : index
    %c0_75 = arith.constant 0 : index
    %151 = vector.load %arg13[%c0_74, %c0_75] : memref<32x128xbf16, #tpu.memory_space<vmem>>, vector<32x128xbf16>
    %152 = arith.truncf %150 : vector<16x32xf32> to vector<16x32xbf16>
    %cst_76 = arith.constant dense<0.000000e+00> : vector<16x128xf32>
    %153 = tpu.matmul %152, %151, %cst_76 {dimension_numbers = #tpu.dot_dimension_numbers<[1], [0], [0], [1], [0, 0, 1, 1], [], []>} : vector<16x32xbf16>, vector<32x128xbf16>, vector<16x128xf32> -> vector<16x128xf32>
    %c0_77 = arith.constant 0 : index
    %c0_78 = arith.constant 0 : index
    %154 = vector.load %arg14[%c0_77, %c0_78] : memref<1x128xf32, #tpu.memory_space<vmem>>, vector<1x128xf32>
    %155 = vector.broadcast %154 : vector<1x128xf32> to vector<16x128xf32>
    %156 = arith.addf %153, %155 : vector<16x128xf32>
    %cst_79 = arith.constant 5.000000e-01 : f32
    %157 = vector.broadcast %cst_79 : f32 to vector<16x128xf32>
    %158 = arith.mulf %157, %156 : vector<16x128xf32>
    %cst_80 = arith.constant 0.707106769 : f32
    %159 = vector.broadcast %cst_80 : f32 to vector<16x128xf32>
    %160 = arith.mulf %156, %159 : vector<16x128xf32>
    %161 = math.erf %160 : vector<16x128xf32>
    %cst_81 = arith.constant 1.000000e+00 : f32
    %162 = vector.broadcast %cst_81 : f32 to vector<16x128xf32>
    %163 = arith.addf %162, %161 : vector<16x128xf32>
    %164 = arith.mulf %158, %163 : vector<16x128xf32>
    %c0_82 = arith.constant 0 : index
    %c0_83 = arith.constant 0 : index
    %165 = vector.load %arg15[%c0_82, %c0_83] : memref<128x32xbf16, #tpu.memory_space<vmem>>, vector<128x32xbf16>
    %166 = arith.truncf %164 : vector<16x128xf32> to vector<16x128xbf16>
    %cst_84 = arith.constant dense<0.000000e+00> : vector<16x32xf32>
    %167 = tpu.matmul %166, %165, %cst_84 {dimension_numbers = #tpu.dot_dimension_numbers<[1], [0], [0], [1], [0, 0, 1, 1], [], []>} : vector<16x128xbf16>, vector<128x32xbf16>, vector<16x32xf32> -> vector<16x32xf32>
    %c0_85 = arith.constant 0 : index
    %c0_86 = arith.constant 0 : index
    %168 = vector.load %arg16[%c0_85, %c0_86] : memref<1x32xf32, #tpu.memory_space<vmem>>, vector<1x32xf32>
    %169 = vector.broadcast %168 : vector<1x32xf32> to vector<16x32xf32>
    %170 = arith.addf %167, %169 : vector<16x32xf32>
    %171 = arith.addf %170, %93 : vector<16x32xf32>
    %c0_87 = arith.constant 0 : index
    %c0_88 = arith.constant 0 : index
    %172 = vector.load %arg21[%c0_87, %c0_88] : memref<16x32xf32, #tpu.memory_space<vmem>>, vector<16x32xf32>
    tpu.vector_store %arg21[%c0_87, %c0_88], %171 {strides = array<i32>} : memref<16x32xf32, #tpu.memory_space<vmem>>, vector<16x32xf32>,
    %c0_89 = arith.constant 0 : index
    %c0_90 = arith.constant 0 : index
    %173 = vector.load %arg12[%c0_89, %c0_90] : memref<1x32xf32, #tpu.memory_space<vmem>>, vector<1x32xf32>
    %174 = arith.mulf %137, %137 : vector<16x32xf32>
    %cst_91 = arith.constant dense<0.000000e+00> : vector<16xf32>
    %175 = vector.multi_reduction <add>, %174, %cst_91 [1] : vector<16x32xf32> to vector<16xf32>
    %176 = vector.shape_cast %175 : vector<16xf32> to vector<16x1xf32>
    %cst_92 = arith.constant 3.200000e+01 : f32
    %177 = vector.broadcast %cst_92 : f32 to vector<16x1xf32>
    %178 = arith.divf %176, %177 : vector<16x1xf32>
    %cst_93 = arith.constant 1.1920929E-7 : f32
    %179 = vector.broadcast %cst_93 : f32 to vector<16x1xf32>
    %180 = arith.addf %178, %179 : vector<16x1xf32>
    %181 = math.rsqrt %180 : vector<16x1xf32>
    %182 = vector.broadcast %181 : vector<16x1xf32> to vector<16x32xf32>
    %183 = arith.mulf %137, %182 : vector<16x32xf32>
    %184 = vector.broadcast %173 : vector<1x32xf32> to vector<16x32xf32>
    %185 = arith.mulf %183, %184 : vector<16x32xf32>
    %c0_94 = arith.constant 0 : index
    %c0_95 = arith.constant 0 : index
    %186 = vector.load %arg17[%c0_94, %c0_95] : memref<32x128xbf16, #tpu.memory_space<vmem>>, vector<32x128xbf16>
    %187 = arith.truncf %185 : vector<16x32xf32> to vector<16x32xbf16>
    %cst_96 = arith.constant dense<0.000000e+00> : vector<16x128xf32>
    %188 = tpu.matmul %187, %186, %cst_96 {dimension_numbers = #tpu.dot_dimension_numbers<[1], [0], [0], [1], [0, 0, 1, 1], [], []>} : vector<16x32xbf16>, vector<32x128xbf16>, vector<16x128xf32> -> vector<16x128xf32>
    %c0_97 = arith.constant 0 : index
    %c0_98 = arith.constant 0 : index
    %189 = vector.load %arg18[%c0_97, %c0_98] : memref<1x128xf32, #tpu.memory_space<vmem>>, vector<1x128xf32>
    %190 = vector.broadcast %189 : vector<1x128xf32> to vector<16x128xf32>
    %191 = arith.addf %188, %190 : vector<16x128xf32>
    %cst_99 = arith.constant 5.000000e-01 : f32
    %192 = vector.broadcast %cst_99 : f32 to vector<16x128xf32>
    %193 = arith.mulf %192, %191 : vector<16x128xf32>
    %cst_100 = arith.constant 0.707106769 : f32
    %194 = vector.broadcast %cst_100 : f32 to vector<16x128xf32>
    %195 = arith.mulf %191, %194 : vector<16x128xf32>
    %196 = math.erf %195 : vector<16x128xf32>
    %cst_101 = arith.constant 1.000000e+00 : f32
    %197 = vector.broadcast %cst_101 : f32 to vector<16x128xf32>
    %198 = arith.addf %197, %196 : vector<16x128xf32>
    %199 = arith.mulf %193, %198 : vector<16x128xf32>
    %c0_102 = arith.constant 0 : index
    %c0_103 = arith.constant 0 : index
    %200 = vector.load %arg19[%c0_102, %c0_103] : memref<128x32xbf16, #tpu.memory_space<vmem>>, vector<128x32xbf16>
    %201 = arith.truncf %199 : vector<16x128xf32> to vector<16x128xbf16>
    %cst_104 = arith.constant dense<0.000000e+00> : vector<16x32xf32>
    %202 = tpu.matmul %201, %200, %cst_104 {dimension_numbers = #tpu.dot_dimension_numbers<[1], [0], [0], [1], [0, 0, 1, 1], [], []>} : vector<16x128xbf16>, vector<128x32xbf16>, vector<16x32xf32> -> vector<16x32xf32>
    %c0_105 = arith.constant 0 : index
    %c0_106 = arith.constant 0 : index
    %203 = vector.load %arg20[%c0_105, %c0_106] : memref<1x32xf32, #tpu.memory_space<vmem>>, vector<1x32xf32>
    %204 = vector.broadcast %203 : vector<1x32xf32> to vector<16x32xf32>
    %205 = arith.addf %202, %204 : vector<16x32xf32>
    %206 = arith.addf %205, %137 : vector<16x32xf32>
    %c0_107 = arith.constant 0 : index
    %c0_108 = arith.constant 0 : index
    %207 = vector.load %arg22[%c0_107, %c0_108] : memref<16x32xf32, #tpu.memory_space<vmem>>, vector<16x32xf32>
    tpu.vector_store %arg22[%c0_107, %c0_108], %206 {strides = array<i32>} : memref<16x32xf32, #tpu.memory_space<vmem>>, vector<16x32xf32>,
    return
  }
}

</mosaic_0001>

<llo_original>
// kernel: tpu_custom_call.1
$region0: #{tpu_custom_call.1}
  #allocation0 [shape = 'u32[]', space=smem, size = 0x4, offset = 0x4, fixed_abs, tag = 'smem constant byte address 0x4 - core index']
  #allocation1 [shape = 'u32[72,128]{1,0:T(1,128)}', space=vmem, size = 0x9000, scoped, tag = 'internal scratch']
  %s0 = inlined_call_operand.vmem [shape: f32[16,32], index: 0, kind: input, shape index: {}]
  %s1 = inlined_call_operand.hbm [shape: f32[16,32], index: 1, kind: input, shape index: {}]
  %s2 = inlined_call_operand.hbm [shape: f32[16,16], index: 2, kind: input, shape index: {}]
  %s3 = inlined_call_operand.hbm [shape: bf16[16,16], index: 3, kind: input, shape index: {}]
  %s4 = inlined_call_operand.hbm [shape: bf16[16,16], index: 4, kind: input, shape index: {}]
  %s5 = inlined_call_operand.vmem [shape: f32[1,32], index: 5, kind: input, shape index: {}]
  %s6 = inlined_call_operand.vmem [shape: f32[1,32], index: 6, kind: input, shape index: {}]
  %s7 = inlined_call_operand.vmem [shape: bf16[32,768], index: 7, kind: input, shape index: {}]
  %s8 = inlined_call_operand.vmem [shape: bf16[32,768], index: 8, kind: input, shape index: {}]
  %s9 = inlined_call_operand.hbm [shape: bf16[128,128], index: 9, kind: input, shape index: {}]
  %s10 = inlined_call_operand.vmem [shape: bf16[128,32], index: 10, kind: input, shape index: {}]
  %s11 = inlined_call_operand.vmem [shape: f32[1,32], index: 11, kind: input, shape index: {}]
  %s12 = inlined_call_operand.vmem [shape: f32[1,32], index: 12, kind: input, shape index: {}]
  %s13 = inlined_call_operand.hbm [shape: bf16[32,128], index: 13, kind: input, shape index: {}]
  %s14 = inlined_call_operand.vmem [shape: f32[1,128], index: 14, kind: input, shape index: {}]
  %s15 = inlined_call_operand.vmem [shape: bf16[128,32], index: 15, kind: input, shape index: {}]
  %s16 = inlined_call_operand.vmem [shape: f32[1,32], index: 16, kind: input, shape index: {}]
  %s17 = inlined_call_operand.hbm [shape: bf16[32,128], index: 17, kind: input, shape index: {}]
  %s18 = inlined_call_operand.vmem [shape: f32[1,128], index: 18, kind: input, shape index: {}]
  %s19 = inlined_call_operand.vmem [shape: bf16[128,32], index: 19, kind: input, shape index: {}]
  %s20 = inlined_call_operand.vmem [shape: f32[1,32], index: 20, kind: input, shape index: {}]
  %s21 = inlined_call_operand.hbm [shape: f32[16,32], index: 21, kind: output, shape index: {0}]
  %s22 = inlined_call_operand.hbm [shape: f32[16,32], index: 22, kind: output, shape index: {1}]
  %23 = xla_tuple %s21, %s22
  %s24 = sld [smem:[#allocation0]]
  $region130: #{tpu_custom_call.1} parent=0
    _
  %s26 = ssub.s32 1, %s24
  %s27 = scalar_select 0, %s26, %s24
  $region1: #{tpu_custom_call.1} parent=0
    #allocation2 [shape = 'u8[8192]{0}', space=vmem, size = 0x2000, scoped, tag = 'input window, operand 1, single buffered']
    #allocation3 [shape = 's32[1]{0}', space=sflag, size = 0x4, scoped, tag = 'scoped memory for tpu_custom_call.1']
    #allocation4 [shape = 's32[1]{0}', space=sflag, size = 0x4, scoped, tag = 'scoped memory for tpu_custom_call.1']
    #allocation5 [shape = 'u8[8192]{0}', space=vmem, size = 0x2000, scoped, tag = 'input window, operand 2, single buffered']
    #allocation6 [shape = 's32[1]{0}', space=sflag, size = 0x4, scoped, tag = 'scoped memory for tpu_custom_call.1']
    #allocation7 [shape = 'u8[4096]{0}', space=vmem, size = 0x1000, scoped, tag = 'input window, operand 3, single buffered']
    #allocation8 [shape = 'u8[4096]{0}', space=vmem, size = 0x1000, scoped, tag = 'input window, operand 4, single buffered']
    #allocation9 [shape = 's32[1]{0}', space=sflag, size = 0x4, scoped, tag = 'scoped memory for tpu_custom_call.1']
    #allocation10 [shape = 'u8[32768]{0}', space=vmem, size = 0x8000, scoped, tag = 'input window, operand 9, single buffered']
    #allocation11 [shape = 'u8[8192]{0}', space=vmem, size = 0x2000, scoped, tag = 'input window, operand 13, single buffered']
    #allocation12 [shape = 's32[1]{0}', space=sflag, size = 0x4, scoped, tag = 'scoped memory for tpu_custom_call.1']
    #allocation13 [shape = 'u8[8192]{0}', space=vmem, size = 0x2000, scoped, tag = 'input window, operand 17, single buffered']
    #allocation14 [shape = 'u8[8192]{0}', space=vmem, size = 0x2000, scoped, tag = 'output window, operand 0, single buffered']
    #allocation15 [shape = 'u8[8192]{0}', space=vmem, size = 0x2000, scoped, tag = 'output window, operand 1, single buffered']
    #allocation16 [shape = 's32[1]{0}', space=sflag, size = 0x4, scoped, tag = 'scoped memory for tpu_custom_call.1']
    %28 = vsyncpa [#allocation3], 0
    %29 = vsyncpa [#allocation6], 0
    %30 = vsyncpa [#allocation9], 0
    %31 = vsyncpa [#allocation12], 0
    %32 = vsyncpa [#allocation4], 0
    %33 = vsyncpa [#allocation16], 0
    // Predicated region
    $region2: #{tpu_custom_call.1} parent=1 // pred_check
      _
    $region3: #{tpu_custom_call.1} parent=1 // pred_check_branch
      %35 = sbr.rel (0) target = $region5
    $region4: #{tpu_custom_call.1} parent=1 // pred_region
      _
    $region5: #{tpu_custom_call.1} parent=1 // pred_fallthru
      _
    // Predicated region
    $region6: #{tpu_custom_call.1} parent=1 // pred_check
      _
    $region7: #{tpu_custom_call.1} parent=1 // pred_check_branch
      %37 = sbr.rel (0) target = $region9
    $region8: #{tpu_custom_call.1} parent=1 // pred_region
      %39 = vsyncadd [#allocation3], 0
      %s40 = sshll.u32 %s1, 4
      %s41 = int_to_ptr.hbm [resolvable:$true] %s40
      %s42 = sshll.u32 [#allocation2], 4
      %s43 = int_to_ptr.vmem [resolvable:$true] %s42
      %48 = dma.hbm_to_vmem [thread:$0]  %s41, 256, %s43, [#allocation3], 128, 128, 8
    $region9: #{tpu_custom_call.1} parent=1 // pred_fallthru
      _
    // Predicated region
    $region10: #{tpu_custom_call.1} parent=1 // pred_check
      _
    $region11: #{tpu_custom_call.1} parent=1 // pred_check_branch
      %50 = sbr.rel (0) target = $region13
    $region12: #{tpu_custom_call.1} parent=1 // pred_region
      %52 = vsyncadd [#allocation6], 0
      %s53 = sshll.u32 %s2, 4
      %s54 = int_to_ptr.hbm [resolvable:$true] %s53
      %s55 = sshll.u32 [#allocation5], 4
      %s56 = int_to_ptr.vmem [resolvable:$true] %s55
      %61 = dma.hbm_to_vmem [thread:$0]  %s54, 256, %s56, [#allocation6], 128, 128, 8
    $region13: #{tpu_custom_call.1} parent=1 // pred_fallthru
      _
    // Predicated region
    $region14: #{tpu_custom_call.1} parent=1 // pred_check
      _
    $region15: #{tpu_custom_call.1} parent=1 // pred_check_branch
      %63 = sbr.rel (0) target = $region17
    $region16: #{tpu_custom_call.1} parent=1 // pred_region
      %65 = vsyncadd [#allocation6], 0
      %s66 = sshll.u32 %s3, 4
      %s67 = int_to_ptr.hbm [resolvable:$true] %s66
      %s68 = sshll.u32 [#allocation7], 4
      %s69 = int_to_ptr.vmem [resolvable:$true] %s68
      %74 = dma.hbm_to_vmem [thread:$0]  %s67, 128, %s69, [#allocation6], 64, 64, 4
    $region17: #{tpu_custom_call.1} parent=1 // pred_fallthru
      _
    // Predicated region
    $region18: #{tpu_custom_call.1} parent=1 // pred_check
      _
    $region19: #{tpu_custom_call.1} parent=1 // pred_check_branch
      %76 = sbr.rel (0) target = $region21
    $region20: #{tpu_custom_call.1} parent=1 // pred_region
      %78 = vsyncadd [#allocation9], 0
      %s79 = sshll.u32 %s4, 4
      %s80 = int_to_ptr.hbm [resolvable:$true] %s79
      %s81 = sshll.u32 [#allocation8], 4
      %s82 = int_to_ptr.vmem [resolvable:$true] %s81
      %87 = dma.hbm_to_vmem [thread:$0]  %s80, 128, %s82, [#allocation9], 64, 64, 4
    $region21: #{tpu_custom_call.1} parent=1 // pred_fallthru
      _
    // Predicated region
    $region22: #{tpu_custom_call.1} parent=1 // pred_check
      _
    $region23: #{tpu_custom_call.1} parent=1 // pred_check_branch
      %89 = sbr.rel (0) target = $region25
    $region24: #{tpu_custom_call.1} parent=1 // pred_region
      _
    $region25: #{tpu_custom_call.1} parent=1 // pred_fallthru
      _
    // Predicated region
    $region26: #{tpu_custom_call.1} parent=1 // pred_check
      _
    $region27: #{tpu_custom_call.1} parent=1 // pred_check_branch
      %91 = sbr.rel (0) target = $region29
    $region28: #{tpu_custom_call.1} parent=1 // pred_region
      _
    $region29: #{tpu_custom_call.1} parent=1 // pred_fallthru
      _
    // Predicated region
    $region30: #{tpu_custom_call.1} parent=1 // pred_check
      _
    $region31: #{tpu_custom_call.1} parent=1 // pred_check_branch
      %93 = sbr.rel (0) target = $region33
    $region32: #{tpu_custom_call.1} parent=1 // pred_region
      _
    $region33: #{tpu_custom_call.1} parent=1 // pred_fallthru
      _
    // Predicated region
    $region34: #{tpu_custom_call.1} parent=1 // pred_check
      _
    $region35: #{tpu_custom_call.1} parent=1 // pred_check_branch
      %95 = sbr.rel (0) target = $region37
    $region36: #{tpu_custom_call.1} parent=1 // pred_region
      _
    $region37: #{tpu_custom_call.1} parent=1 // pred_fallthru
      _
    // Predicated region
    $region38: #{tpu_custom_call.1} parent=1 // pred_check
      _
    $region39: #{tpu_custom_call.1} parent=1 // pred_check_branch
      %97 = sbr.rel (0) target = $region41
    $region40: #{tpu_custom_call.1} parent=1 // pred_region
      %99 = vsyncadd [#allocation9], 0
      %s100 = sshll.u32 %s9, 4
      %s101 = int_to_ptr.hbm [resolvable:$true] %s100
      %s102 = sshll.u32 [#allocation10], 4
      %s103 = int_to_ptr.vmem [resolvable:$true] %s102
      %108 = dma.hbm_to_vmem [thread:$0]  %s101, 1024, %s103, [#allocation9], 64, 64, 4
    $region41: #{tpu_custom_call.1} parent=1 // pred_fallthru
      _
    // Predicated region
    $region42: #{tpu_custom_call.1} parent=1 // pred_check
      _
    $region43: #{tpu_custom_call.1} parent=1 // pred_check_branch
      %110 = sbr.rel (0) target = $region45
    $region44: #{tpu_custom_call.1} parent=1 // pred_region
      _
    $region45: #{tpu_custom_call.1} parent=1 // pred_fallthru
      _
    // Predicated region
    $region46: #{tpu_custom_call.1} parent=1 // pred_check
      _
    $region47: #{tpu_custom_call.1} parent=1 // pred_check_branch
      %112 = sbr.rel (0) target = $region49
    $region48: #{tpu_custom_call.1} parent=1 // pred_region
      _
    $region49: #{tpu_custom_call.1} parent=1 // pred_fallthru
      _
    // Predicated region
    $region50: #{tpu_custom_call.1} parent=1 // pred_check
      _
    $region51: #{tpu_custom_call.1} parent=1 // pred_check_branch
      %114 = sbr.rel (0) target = $region53
    $region52: #{tpu_custom_call.1} parent=1 // pred_region
      _
    $region53: #{tpu_custom_call.1} parent=1 // pred_fallthru
      _
    // Predicated region
    $region54: #{tpu_custom_call.1} parent=1 // pred_check
      _
    $region55: #{tpu_custom_call.1} parent=1 // pred_check_branch
      %116 = sbr.rel (0) target = $region57
    $region56: #{tpu_custom_call.1} parent=1 // pred_region
      %118 = vsyncadd [#allocation12], 0
      %s119 = sshll.u32 %s13, 4
      %s120 = int_to_ptr.hbm [resolvable:$true] %s119
      %s121 = sshll.u32 [#allocation11], 4
      %s122 = int_to_ptr.vmem [resolvable:$true] %s121
      %127 = dma.hbm_to_vmem [thread:$0]  %s120, 256, %s122, [#allocation12], 64, 64, 4
    $region57: #{tpu_custom_call.1} parent=1 // pred_fallthru
      _
    // Predicated region
    $region58: #{tpu_custom_call.1} parent=1 // pred_check
      _
    $region59: #{tpu_custom_call.1} parent=1 // pred_check_branch
      %129 = sbr.rel (0) target = $region61
    $region60: #{tpu_custom_call.1} parent=1 // pred_region
      _
    $region61: #{tpu_custom_call.1} parent=1 // pred_fallthru
      _
    // Predicated region
    $region62: #{tpu_custom_call.1} parent=1 // pred_check
      _
    $region63: #{tpu_custom_call.1} parent=1 // pred_check_branch
      %131 = sbr.rel (0) target = $region65
    $region64: #{tpu_custom_call.1} parent=1 // pred_region
      _
    $region65: #{tpu_custom_call.1} parent=1 // pred_fallthru
      _
    // Predicated region
    $region66: #{tpu_custom_call.1} parent=1 // pred_check
      _
    $region67: #{tpu_custom_call.1} parent=1 // pred_check_branch
      %133 = sbr.rel (0) target = $region69
    $region68: #{tpu_custom_call.1} parent=1 // pred_region
      _
    $region69: #{tpu_custom_call.1} parent=1 // pred_fallthru
      _
    // Predicated region
    $region70: #{tpu_custom_call.1} parent=1 // pred_check
      _
    $region71: #{tpu_custom_call.1} parent=1 // pred_check_branch
      %135 = sbr.rel (0) target = $region73
    $region72: #{tpu_custom_call.1} parent=1 // pred_region
      %137 = vsyncadd [#allocation12], 0
      %s138 = sshll.u32 %s17, 4
      %s139 = int_to_ptr.hbm [resolvable:$true] %s138
      %s140 = sshll.u32 [#allocation13], 4
      %s141 = int_to_ptr.vmem [resolvable:$true] %s140
      %146 = dma.hbm_to_vmem [thread:$0]  %s139, 256, %s141, [#allocation12], 64, 64, 4
    $region73: #{tpu_custom_call.1} parent=1 // pred_fallthru
      _
    // Predicated region
    $region74: #{tpu_custom_call.1} parent=1 // pred_check
      _
    $region75: #{tpu_custom_call.1} parent=1 // pred_check_branch
      %148 = sbr.rel (0) target = $region77
    $region76: #{tpu_custom_call.1} parent=1 // pred_region
      _
    $region77: #{tpu_custom_call.1} parent=1 // pred_fallthru
      _
    // Predicated region
    $region78: #{tpu_custom_call.1} parent=1 // pred_check
      _
    $region79: #{tpu_custom_call.1} parent=1 // pred_check_branch
      %150 = sbr.rel (0) target = $region81
    $region80: #{tpu_custom_call.1} parent=1 // pred_region
      _
    $region81: #{tpu_custom_call.1} parent=1 // pred_fallthru
      _
    // Predicated region
    $region82: #{tpu_custom_call.1} parent=1 // pred_check
      _
    $region83: #{tpu_custom_call.1} parent=1 // pred_check_branch
      %152 = sbr.rel (0) target = $region85
    $region84: #{tpu_custom_call.1} parent=1 // pred_region
      _
    $region85: #{tpu_custom_call.1} parent=1 // pred_fallthru
      _
    // Predicated region
    $region86: #{tpu_custom_call.1} parent=1 // pred_check
      _
    $region87: #{tpu_custom_call.1} parent=1 // pred_check_branch
      %154 = sbr.rel (0) target = $region89
    $region88: #{tpu_custom_call.1} parent=1 // pred_region
      %156 = dma.done [#allocation3], 256
    $region89: #{tpu_custom_call.1} parent=1 // pred_fallthru
      _
    // Predicated region
    $region90: #{tpu_custom_call.1} parent=1 // pred_check
      _
    $region91: #{tpu_custom_call.1} parent=1 // pred_check_branch
      %158 = sbr.rel (0) target = $region93
    $region92: #{tpu_custom_call.1} parent=1 // pred_region
      %160 = dma.done [#allocation6], 256
    $region93: #{tpu_custom_call.1} parent=1 // pred_fallthru
      _
    // Predicated region
    $region94: #{tpu_custom_call.1} parent=1 // pred_check
      _
    $region95: #{tpu_custom_call.1} parent=1 // pred_check_branch
      %162 = sbr.rel (0) target = $region97
    $region96: #{tpu_custom_call.1} parent=1 // pred_region
      %164 = dma.done [#allocation6], 128
    $region97: #{tpu_custom_call.1} parent=1 // pred_fallthru
      _
    // Predicated region
    $region98: #{tpu_custom_call.1} parent=1 // pred_check
      _
    $region99: #{tpu_custom_call.1} parent=1 // pred_check_branch
      %166 = sbr.rel (0) target = $region101
    $region100: #{tpu_custom_call.1} parent=1 // pred_region
      %168 = dma.done [#allocation9], 128
    $region101: #{tpu_custom_call.1} parent=1 // pred_fallthru
      _
    // Predicated region
    $region102: #{tpu_custom_call.1} parent=1 // pred_check
      _
    $region103: #{tpu_custom_call.1} parent=1 // pred_check_branch
      %170 = sbr.rel (0) target = $region105
    $region104: #{tpu_custom_call.1} parent=1 // pred_region
      %172 = dma.done [#allocation9], 1024
    $region105: #{tpu_custom_call.1} parent=1 // pred_fallthru
      _
    // Predicated region
    $region106: #{tpu_custom_call.1} parent=1 // pred_check
      _
    $region107: #{tpu_custom_call.1} parent=1 // pred_check_branch
      %174 = sbr.rel (0) target = $region109
    $region108: #{tpu_custom_call.1} parent=1 // pred_region
      %176 = dma.done [#allocation12], 256
    $region109: #{tpu_custom_call.1} parent=1 // pred_fallthru
      _
    // Predicated region
    $region110: #{tpu_custom_call.1} parent=1 // pred_check
      _
    $region111: #{tpu_custom_call.1} parent=1 // pred_check_branch
      %178 = sbr.rel (0) target = $region113
    $region112: #{tpu_custom_call.1} parent=1 // pred_region
      %180 = dma.done [#allocation12], 256
    $region113: #{tpu_custom_call.1} parent=1 // pred_fallthru
      _
    %v182 = vld [vmem:[%s0] sm:$0xff]
    %v183 = vld [vmem:[%s0 + $0x8] sm:$0xff]
    %v184 = vld [vmem:[#allocation2] sm:$0xff]
    %v185 = vld [vmem:[#allocation2 + $0x8] sm:$0xff]
    %v186 = vld [vmem:[%s5] sm:$0x1]
    %v187 = vmul.f32 %v182, %v182
    %v188 = vmul.f32 %v183, %v183
    %vm189 = vcmask 261120
    %v190 = vsel %vm189, %v187, 0.0
    %191 = vadd.xlane.f32.xlu0 %v190
    %v192 = vpop.xlane.xlu0 %191
    %v193 = vsel %vm189, %v188, 0.0
    %194 = vadd.xlane.f32.xlu0 %v193
    %v195 = vpop.xlane.xlu0 %194
    %v196 = vrcp.pop 32.0
    %v197 = vmul.f32 32.0, %v196
    %v198 = vsub.f32 1.0, %v197
    %v199 = vmul.f32 %v196, %v198
    %v200 = vadd.f32 %v196, %v199
    %vm201 = vweird.f32 %v196
    %v202 = vsel %vm201, %v196, %v200
    %v203 = vmul.f32 %v192, %v202
    %v204 = vmul.f32 %v195, %v202
    %v205 = vadd.f32 %v203, 1.1920929e-07
    %v206 = vadd.f32 %v204, 1.1920929e-07
    %v207 = vrsqrt.pop %v205
    %v208 = vmul.f32 %v207, %v205
    %v209 = vmul.f32 %v208, %v207
    %v210 = vmul.f32 0.5, %v209
    %v211 = vsub.f32 1.5, %v210
    %v212 = vmul.f32 %v207, %v211
    %vm213 = vweird.f32 %v205
    %vm214 = vweird.f32 %v207
    %vm215 = vmor %vm213, %vm214
    %v216 = vsel %vm215, %v207, %v212
    %v217 = vrsqrt.pop %v206
    %v218 = vmul.f32 %v217, %v206
    %v219 = vmul.f32 %v218, %v217
    %v220 = vmul.f32 0.5, %v219
    %v221 = vsub.f32 1.5, %v220
    %v222 = vmul.f32 %v217, %v221
    %vm223 = vweird.f32 %v206
    %vm224 = vweird.f32 %v217
    %vm225 = vmor %vm223, %vm224
    %v226 = vsel %vm225, %v217, %v222
    %v227 = vmul.f32 %v182, %v216
    %v228 = vmul.f32 %v183, %v226
    %v230 = vperm.slane %v186, 0
    %v232 = vmul.f32 %v227, %v230
    %v233 = vmul.f32 %v228, %v230
    %v234 = vadd.f32 %v232, %v182
    %v235 = vadd.f32 %v233, %v183
    %v236 = vld [vmem:[%s6] sm:$0x1]
    %v237 = vmul.f32 %v184, %v184
    %v238 = vmul.f32 %v185, %v185
    %v239 = vsel %vm189, %v237, 0.0
    %240 = vadd.xlane.f32.xlu0 %v239
    %v241 = vpop.xlane.xlu0 %240
    %v242 = vsel %vm189, %v238, 0.0
    %243 = vadd.xlane.f32.xlu0 %v242
    %v244 = vpop.xlane.xlu0 %243
    %v245 = vmul.f32 %v241, %v202
    %v246 = vmul.f32 %v244, %v202
    %v247 = vadd.f32 %v245, 1.1920929e-07
    %v248 = vadd.f32 %v246, 1.1920929e-07
    %v249 = vrsqrt.pop %v247
    %v250 = vmul.f32 %v249, %v247
    %v251 = vmul.f32 %v250, %v249
    %v252 = vmul.f32 0.5, %v251
    %v253 = vsub.f32 1.5, %v252
    %v254 = vmul.f32 %v249, %v253
    %vm255 = vweird.f32 %v247
    %vm256 = vweird.f32 %v249
    %vm257 = vmor %vm255, %vm256
    %v258 = vsel %vm257, %v249, %v254
    %v259 = vrsqrt.pop %v248
    %v260 = vmul.f32 %v259, %v248
    %v261 = vmul.f32 %v260, %v259
    %v262 = vmul.f32 0.5, %v261
    %v263 = vsub.f32 1.5, %v262
    %v264 = vmul.f32 %v259, %v263
    %vm265 = vweird.f32 %v248
    %vm266 = vweird.f32 %v259
    %vm267 = vmor %vm265, %vm266
    %v268 = vsel %vm267, %v259, %v264
    %v269 = vmul.f32 %v184, %v258
    %v270 = vmul.f32 %v185, %v268
    %v272 = vperm.slane %v236, 0
    %v274 = vmul.f32 %v269, %v272
    %v275 = vmul.f32 %v270, %v272
    %v276 = vadd.f32 %v274, %v184
    %v277 = vadd.f32 %v275, %v185
    %v278 = vld [vmem:[%s7] sm:$0xff]
    %v279 = vld [vmem:[%s7 + $0x8] sm:$0xff]
    %v280 = vld [vmem:[%s7 + $0x10] sm:$0xff]
    %v281 = vld [vmem:[%s7 + $0x18] sm:$0xff]
    %v282 = vld [vmem:[%s7 + $0x20] sm:$0xff]
    %v283 = vld [vmem:[%s7 + $0x28] sm:$0xff]
    %v284 = vld [vmem:[%s7 + $0x30] sm:$0xff]
    %v285 = vld [vmem:[%s7 + $0x38] sm:$0xff]
    %v286 = vld [vmem:[%s7 + $0x40] sm:$0xff]
    %v287 = vld [vmem:[%s7 + $0x48] sm:$0xff]
    %v288 = vld [vmem:[%s7 + $0x50] sm:$0xff]
    %v289 = vld [vmem:[%s7 + $0x58] sm:$0xff]
    %v290 = vpack.c.bf16 %v235, %v234
    %v303 = vunpack.c.l.b16 %v278
    %v304 = vunpack.c.h.b16 %v278
    %v305 = vunpack.c.l.b16 %v279
    %v306 = vunpack.c.h.b16 %v279
    %v307 = vunpack.c.l.b16 %v280
    %v308 = vunpack.c.h.b16 %v280
    %v309 = vunpack.c.l.b16 %v281
    %v310 = vunpack.c.h.b16 %v281
    %v311 = vunpack.c.l.b16 %v282
    %v312 = vunpack.c.h.b16 %v282
    %v313 = vunpack.c.l.b16 %v283
    %v314 = vunpack.c.h.b16 %v283
    %v315 = vunpack.c.l.b16 %v284
    %v316 = vunpack.c.h.b16 %v284
    %v317 = vunpack.c.l.b16 %v285
    %v318 = vunpack.c.h.b16 %v285
    %v319 = vunpack.c.l.b16 %v286
    %v320 = vunpack.c.h.b16 %v286
    %v321 = vunpack.c.l.b16 %v287
    %v322 = vunpack.c.h.b16 %v287
    %v323 = vunpack.c.l.b16 %v288
    %v324 = vunpack.c.h.b16 %v288
    %v325 = vunpack.c.l.b16 %v289
    %v326 = vunpack.c.h.b16 %v289
    %v327 = vpack.c.b16 %v309, %v303
    %v328 = vpack.c.b16 %v310, %v304
    %v329 = vpack.c.b16 %v311, %v305
    %v330 = vpack.c.b16 %v312, %v306
    %v331 = vpack.c.b16 %v313, %v307
    %v332 = vpack.c.b16 %v314, %v308
    %v333 = vpack.c.b16 %v321, %v315
    %v334 = vpack.c.b16 %v322, %v316
    %v335 = vpack.c.b16 %v323, %v317
    %v336 = vpack.c.b16 %v324, %v318
    %v337 = vpack.c.b16 %v325, %v319
    %v338 = vpack.c.b16 %v326, %v320
    %v352 = vsel %vm189, %v290, 0
    %354 = vmatpush.bf16.msra.mxu0 0
    %355 = vmatpush.bf16.msra.mxu0 0
    %356 = vmatpush.bf16.msra.mxu0 0
    %357 = vmatpush.bf16.msra.mxu0 0
    %358 = vmatpush.bf16.msra.mxu0 0
    %359 = vmatpush.bf16.msra.mxu0 0
    %360 = vmatpush.bf16.msra.mxu0 %v333
    %361 = vmatpush.bf16.msra.mxu0 %v327
    %362 = vmatmul.bf16.gmra.mxu0 %v352
    %v363 = vpop.f32.mrf.mxu0
    %v364 = vadd.f32 0.0, %v363
    %v365 = vpop.f32.mrf.mxu0
    %v366 = vadd.f32 0.0, %v365
    %367 = vdwg.mxu0
    %368 = vmatpush.bf16.msra.mxu0 0
    %369 = vmatpush.bf16.msra.mxu0 0
    %370 = vmatpush.bf16.msra.mxu0 0
    %371 = vmatpush.bf16.msra.mxu0 0
    %372 = vmatpush.bf16.msra.mxu0 0
    %373 = vmatpush.bf16.msra.mxu0 0
    %374 = vmatpush.bf16.msra.mxu0 %v334
    %375 = vmatpush.bf16.msra.mxu0 %v328
    %376 = vmatmul.bf16.gmra.mxu0 %v352
    %v377 = vpop.f32.mrf.mxu0
    %v378 = vadd.f32 0.0, %v377
    %v379 = vpop.f32.mrf.mxu0
    %v380 = vadd.f32 0.0, %v379
    %381 = vdwg.mxu0
    %382 = vmatpush.bf16.msra.mxu0 0
    %383 = vmatpush.bf16.msra.mxu0 0
    %384 = vmatpush.bf16.msra.mxu0 0
    %385 = vmatpush.bf16.msra.mxu0 0
    %386 = vmatpush.bf16.msra.mxu0 0
    %387 = vmatpush.bf16.msra.mxu0 0
    %388 = vmatpush.bf16.msra.mxu0 %v335
    %389 = vmatpush.bf16.msra.mxu0 %v329
    %390 = vmatmul.bf16.gmra.mxu0 %v352
    %v391 = vpop.f32.mrf.mxu0
    %v392 = vadd.f32 0.0, %v391
    %v393 = vpop.f32.mrf.mxu0
    %v394 = vadd.f32 0.0, %v393
    %395 = vdwg.mxu0
    %396 = vmatpush.bf16.msra.mxu0 0
    %397 = vmatpush.bf16.msra.mxu0 0
    %398 = vmatpush.bf16.msra.mxu0 0
    %399 = vmatpush.bf16.msra.mxu0 0
    %400 = vmatpush.bf16.msra.mxu0 0
    %401 = vmatpush.bf16.msra.mxu0 0
    %402 = vmatpush.bf16.msra.mxu0 %v336
    %403 = vmatpush.bf16.msra.mxu0 %v330
    %404 = vmatmul.bf16.gmra.mxu0 %v352
    %v405 = vpop.f32.mrf.mxu0
    %v406 = vadd.f32 0.0, %v405
    %v407 = vpop.f32.mrf.mxu0
    %v408 = vadd.f32 0.0, %v407
    %409 = vdwg.mxu0
    %410 = vmatpush.bf16.msra.mxu0 0
    %411 = vmatpush.bf16.msra.mxu0 0
    %412 = vmatpush.bf16.msra.mxu0 0
    %413 = vmatpush.bf16.msra.mxu0 0
    %414 = vmatpush.bf16.msra.mxu0 0
    %415 = vmatpush.bf16.msra.mxu0 0
    %416 = vmatpush.bf16.msra.mxu0 %v337
    %417 = vmatpush.bf16.msra.mxu0 %v331
    %418 = vmatmul.bf16.gmra.mxu0 %v352
    %v419 = vpop.f32.mrf.mxu0
    %v420 = vadd.f32 0.0, %v419
    %v421 = vpop.f32.mrf.mxu0
    %v422 = vadd.f32 0.0, %v421
    %423 = vdwg.mxu0
    %424 = vmatpush.bf16.msra.mxu0 0
    %425 = vmatpush.bf16.msra.mxu0 0
    %426 = vmatpush.bf16.msra.mxu0 0
    %427 = vmatpush.bf16.msra.mxu0 0
    %428 = vmatpush.bf16.msra.mxu0 0
    %429 = vmatpush.bf16.msra.mxu0 0
    %430 = vmatpush.bf16.msra.mxu0 %v338
    %431 = vmatpush.bf16.msra.mxu0 %v332
    %432 = vmatmul.bf16.gmra.mxu0 %v352
    %v433 = vpop.f32.mrf.mxu0
    %v434 = vadd.f32 0.0, %v433
    %v435 = vpop.f32.mrf.mxu0
    %v436 = vadd.f32 0.0, %v435
    %437 = vdwg.mxu0
    %v438 = vld [vmem:[%s8] sm:$0xff]
    %v439 = vld [vmem:[%s8 + $0x8] sm:$0xff]
    %v440 = vld [vmem:[%s8 + $0x10] sm:$0xff]
    %v441 = vld [vmem:[%s8 + $0x18] sm:$0xff]
    %v442 = vld [vmem:[%s8 + $0x20] sm:$0xff]
    %v443 = vld [vmem:[%s8 + $0x28] sm:$0xff]
    %v444 = vld [vmem:[%s8 + $0x30] sm:$0xff]
    %v445 = vld [vmem:[%s8 + $0x38] sm:$0xff]
    %v446 = vld [vmem:[%s8 + $0x40] sm:$0xff]
    %v447 = vld [vmem:[%s8 + $0x48] sm:$0xff]
    %v448 = vld [vmem:[%s8 + $0x50] sm:$0xff]
    %v449 = vld [vmem:[%s8 + $0x58] sm:$0xff]
    %v450 = vpack.c.bf16 %v277, %v276
    %v463 = vunpack.c.l.b16 %v438
    %v464 = vunpack.c.h.b16 %v438
    %v465 = vunpack.c.l.b16 %v439
    %v466 = vunpack.c.h.b16 %v439
    %v467 = vunpack.c.l.b16 %v440
    %v468 = vunpack.c.h.b16 %v440
    %v469 = vunpack.c.l.b16 %v441
    %v470 = vunpack.c.h.b16 %v441
    %v471 = vunpack.c.l.b16 %v442
    %v472 = vunpack.c.h.b16 %v442
    %v473 = vunpack.c.l.b16 %v443
    %v474 = vunpack.c.h.b16 %v443
    %v475 = vunpack.c.l.b16 %v444
    %v476 = vunpack.c.h.b16 %v444
    %v477 = vunpack.c.l.b16 %v445
    %v478 = vunpack.c.h.b16 %v445
    %v479 = vunpack.c.l.b16 %v446
    %v480 = vunpack.c.h.b16 %v446
    %v481 = vunpack.c.l.b16 %v447
    %v482 = vunpack.c.h.b16 %v447
    %v483 = vunpack.c.l.b16 %v448
    %v484 = vunpack.c.h.b16 %v448
    %v485 = vunpack.c.l.b16 %v449
    %v486 = vunpack.c.h.b16 %v449
    %v487 = vpack.c.b16 %v469, %v463
    %v488 = vpack.c.b16 %v470, %v464
    %v489 = vpack.c.b16 %v471, %v465
    %v490 = vpack.c.b16 %v472, %v466
    %v491 = vpack.c.b16 %v473, %v467
    %v492 = vpack.c.b16 %v474, %v468
    %v493 = vpack.c.b16 %v481, %v475
    %v494 = vpack.c.b16 %v482, %v476
    %v495 = vpack.c.b16 %v483, %v477
    %v496 = vpack.c.b16 %v484, %v478
    %v497 = vpack.c.b16 %v485, %v479
    %v498 = vpack.c.b16 %v486, %v480
    %v512 = vsel %vm189, %v450, 0
    %514 = vmatpush.bf16.msra.mxu0 0
    %515 = vmatpush.bf16.msra.mxu0 0
    %516 = vmatpush.bf16.msra.mxu0 0
    %517 = vmatpush.bf16.msra.mxu0 0
    %518 = vmatpush.bf16.msra.mxu0 0
    %519 = vmatpush.bf16.msra.mxu0 0
    %520 = vmatpush.bf16.msra.mxu0 %v493
    %521 = vmatpush.bf16.msra.mxu0 %v487
    %522 = vmatmul.bf16.gmra.mxu0 %v512
    %v523 = vpop.f32.mrf.mxu0
    %v524 = vadd.f32 0.0, %v523
    %v525 = vpop.f32.mrf.mxu0
    %v526 = vadd.f32 0.0, %v525
    %527 = vdwg.mxu0
    %528 = vmatpush.bf16.msra.mxu0 0
    %529 = vmatpush.bf16.msra.mxu0 0
    %530 = vmatpush.bf16.msra.mxu0 0
    %531 = vmatpush.bf16.msra.mxu0 0
    %532 = vmatpush.bf16.msra.mxu0 0
    %533 = vmatpush.bf16.msra.mxu0 0
    %534 = vmatpush.bf16.msra.mxu0 %v494
    %535 = vmatpush.bf16.msra.mxu0 %v488
    %536 = vmatmul.bf16.gmra.mxu0 %v512
    %v537 = vpop.f32.mrf.mxu0
    %v538 = vadd.f32 0.0, %v537
    %v539 = vpop.f32.mrf.mxu0
    %v540 = vadd.f32 0.0, %v539
    %541 = vdwg.mxu0
    %542 = vmatpush.bf16.msra.mxu0 0
    %543 = vmatpush.bf16.msra.mxu0 0
    %544 = vmatpush.bf16.msra.mxu0 0
    %545 = vmatpush.bf16.msra.mxu0 0
    %546 = vmatpush.bf16.msra.mxu0 0
    %547 = vmatpush.bf16.msra.mxu0 0
    %548 = vmatpush.bf16.msra.mxu0 %v495
    %549 = vmatpush.bf16.msra.mxu0 %v489
    %550 = vmatmul.bf16.gmra.mxu0 %v512
    %v551 = vpop.f32.mrf.mxu0
    %v552 = vadd.f32 0.0, %v551
    %v553 = vpop.f32.mrf.mxu0
    %v554 = vadd.f32 0.0, %v553
    %555 = vdwg.mxu0
    %556 = vmatpush.bf16.msra.mxu0 0
    %557 = vmatpush.bf16.msra.mxu0 0
    %558 = vmatpush.bf16.msra.mxu0 0
    %559 = vmatpush.bf16.msra.mxu0 0
    %560 = vmatpush.bf16.msra.mxu0 0
    %561 = vmatpush.bf16.msra.mxu0 0
    %562 = vmatpush.bf16.msra.mxu0 %v496
    %563 = vmatpush.bf16.msra.mxu0 %v490
    %564 = vmatmul.bf16.gmra.mxu0 %v512
    %v565 = vpop.f32.mrf.mxu0
    %v566 = vadd.f32 0.0, %v565
    %v567 = vpop.f32.mrf.mxu0
    %v568 = vadd.f32 0.0, %v567
    %569 = vdwg.mxu0
    %570 = vmatpush.bf16.msra.mxu0 0
    %571 = vmatpush.bf16.msra.mxu0 0
    %572 = vmatpush.bf16.msra.mxu0 0
    %573 = vmatpush.bf16.msra.mxu0 0
    %574 = vmatpush.bf16.msra.mxu0 0
    %575 = vmatpush.bf16.msra.mxu0 0
    %576 = vmatpush.bf16.msra.mxu0 %v497
    %577 = vmatpush.bf16.msra.mxu0 %v491
    %578 = vmatmul.bf16.gmra.mxu0 %v512
    %v579 = vpop.f32.mrf.mxu0
    %v580 = vadd.f32 0.0, %v579
    %v581 = vpop.f32.mrf.mxu0
    %v582 = vadd.f32 0.0, %v581
    %583 = vdwg.mxu0
    %584 = vmatpush.bf16.msra.mxu0 0
    %585 = vmatpush.bf16.msra.mxu0 0
    %586 = vmatpush.bf16.msra.mxu0 0
    %587 = vmatpush.bf16.msra.mxu0 0
    %588 = vmatpush.bf16.msra.mxu0 0
    %589 = vmatpush.bf16.msra.mxu0 0
    %590 = vmatpush.bf16.msra.mxu0 %v498
    %591 = vmatpush.bf16.msra.mxu0 %v492
    %592 = vmatmul.bf16.gmra.mxu0 %v512
    %v593 = vpop.f32.mrf.mxu0
    %v594 = vadd.f32 0.0, %v593
    %v595 = vpop.f32.mrf.mxu0
    %v596 = vadd.f32 0.0, %v595
    %597 = vdwg.mxu0
    %v598 = vld [vmem:[#allocation5] sm:$0xff]
    %v599 = vld [vmem:[#allocation5 + $0x8] sm:$0xff]
    %v600 = vpack.c.bf16 %v599, %v598
    %v601 = vpack.c.bf16 %v366, %v364
    %vm602 = vcmask 130048
    %v604 = vsel %vm602, %v600, 0
    %606 = vmatpush.bf16.msra.mxu0 0
    %607 = vmatpush.bf16.msra.mxu0 0
    %608 = vmatpush.bf16.msra.mxu0 0
    %609 = vmatpush.bf16.msra.mxu0 0
    %610 = vmatpush.bf16.msra.mxu0 0
    %611 = vmatpush.bf16.msra.mxu0 0
    %612 = vmatpush.bf16.msra.mxu0 0
    %613 = vmatpush.bf16.msra.mxu0 %v601
    %614 = vmatmul.bf16.gmra.mxu0 %v604
    %v615 = vpop.f32.mrf.mxu0
    %v616 = vadd.f32 0.0, %v615
    %v617 = vpop.f32.mrf.mxu0
    %v618 = vadd.f32 0.0, %v617
    %619 = vdwg.mxu0
    %v620 = vld [vmem:[#allocation8] sm:$0xf]
    %v621 = vld [vmem:[#allocation8 + $0x4] sm:$0xf]
    %v622 = vpack.c.bf16 %v526, %v524
    %v625 = vunpack.c.l.b16 %v620
    %v626 = vunpack.c.l.b16 %v621
    %v627 = vpack.c.b16 %v626, %v625
    %v629 = vsel %vm602, %v627, 0
    %631 = vmatpush.bf16.msra.mxu0 0
    %632 = vmatpush.bf16.msra.mxu0 0
    %633 = vmatpush.bf16.msra.mxu0 0
    %634 = vmatpush.bf16.msra.mxu0 0
    %635 = vmatpush.bf16.msra.mxu0 0
    %636 = vmatpush.bf16.msra.mxu0 0
    %637 = vmatpush.bf16.msra.mxu0 0
    %638 = vmatpush.bf16.msra.mxu0 %v622
    %639 = vmatmul.bf16.gmra.mxu0 %v629
    %v640 = vpop.f32.mrf.mxu0
    %v641 = vadd.f32 0.0, %v640
    %v642 = vpop.f32.mrf.mxu0
    %v643 = vadd.f32 0.0, %v642
    %644 = vdwg.mxu0
    %v645 = vld [vmem:[#allocation7] sm:$0xf]
    %v646 = vld [vmem:[#allocation7 + $0x4] sm:$0xf]
    %v647 = vpack.c.bf16 %v436, %v434
    %v650 = vunpack.c.l.b16 %v645
    %v651 = vunpack.c.l.b16 %v646
    %v652 = vpack.c.b16 %v651, %v650
    %v654 = vsel %vm602, %v652, 0
    %656 = vmatpush.bf16.msra.mxu0 0
    %657 = vmatpush.bf16.msra.mxu0 0
    %658 = vmatpush.bf16.msra.mxu0 0
    %659 = vmatpush.bf16.msra.mxu0 0
    %660 = vmatpush.bf16.msra.mxu0 0
    %661 = vmatpush.bf16.msra.mxu0 0
    %662 = vmatpush.bf16.msra.mxu0 0
    %663 = vmatpush.bf16.msra.mxu0 %v647
    %664 = vmatmul.bf16.gmra.mxu0 %v654
    %v665 = vpop.f32.mrf.mxu0
    %v666 = vadd.f32 0.0, %v665
    %v667 = vpop.f32.mrf.mxu0
    %v668 = vadd.f32 0.0, %v667
    %669 = vdwg.mxu0
    %v670 = vmul.f32 %v616, %v378
    %v671 = vmul.f32 %v618, %v380
    %v672 = vld [vmem:[#allocation10] sm:$0xf]
    %v673 = vld [vmem:[#allocation10 + $0x4] sm:$0xf]
    %v674 = vld [vmem:[#allocation10 + $0x8] sm:$0xf]
    %v675 = vld [vmem:[#allocation10 + $0xc] sm:$0xf]
    %v676 = vld [vmem:[#allocation10 + $0x10] sm:$0xf]
    %v677 = vld [vmem:[#allocation10 + $0x14] sm:$0xf]
    %v678 = vld [vmem:[#allocation10 + $0x18] sm:$0xf]
    %v679 = vld [vmem:[#allocation10 + $0x1c] sm:$0xf]
    %v680 = vld [vmem:[#allocation10 + $0x20] sm:$0xf]
    %v681 = vld [vmem:[#allocation10 + $0x24] sm:$0xf]
    %v682 = vld [vmem:[#allocation10 + $0x28] sm:$0xf]
    %v683 = vld [vmem:[#allocation10 + $0x2c] sm:$0xf]
    %v684 = vld [vmem:[#allocation10 + $0x30] sm:$0xf]
    %v685 = vld [vmem:[#allocation10 + $0x34] sm:$0xf]
    %v686 = vld [vmem:[#allocation10 + $0x38] sm:$0xf]
    %v687 = vld [vmem:[#allocation10 + $0x3c] sm:$0xf]
    %v688 = vpack.c.bf16 %v671, %v670
    %v705 = vunpack.c.l.b16 %v672
    %v706 = vunpack.c.l.b16 %v673
    %v707 = vunpack.c.l.b16 %v674
    %v708 = vunpack.c.l.b16 %v675
    %v709 = vunpack.c.l.b16 %v676
    %v710 = vunpack.c.l.b16 %v677
    %v711 = vunpack.c.l.b16 %v678
    %v712 = vunpack.c.l.b16 %v679
    %v713 = vunpack.c.l.b16 %v680
    %v714 = vunpack.c.l.b16 %v681
    %v715 = vunpack.c.l.b16 %v682
    %v716 = vunpack.c.l.b16 %v683
    %v717 = vunpack.c.l.b16 %v684
    %v718 = vunpack.c.l.b16 %v685
    %v719 = vunpack.c.l.b16 %v686
    %v720 = vunpack.c.l.b16 %v687
    %v721 = vpack.c.b16 %v706, %v705
    %v722 = vpack.c.b16 %v708, %v707
    %v723 = vpack.c.b16 %v710, %v709
    %v724 = vpack.c.b16 %v712, %v711
    %v725 = vpack.c.b16 %v714, %v713
    %v726 = vpack.c.b16 %v716, %v715
    %v727 = vpack.c.b16 %v718, %v717
    %v728 = vpack.c.b16 %v720, %v719
    %737 = vmatpush.bf16.msra.mxu0 %v728
    %738 = vmatpush.bf16.msra.mxu0 %v727
    %739 = vmatpush.bf16.msra.mxu0 %v726
    %740 = vmatpush.bf16.msra.mxu0 %v725
    %741 = vmatpush.bf16.msra.mxu0 %v724
    %742 = vmatpush.bf16.msra.mxu0 %v723
    %743 = vmatpush.bf16.msra.mxu0 %v722
    %744 = vmatpush.bf16.msra.mxu0 %v721
    %745 = vmatmul.bf16.gmra.mxu0 %v688
    %v746 = vpop.f32.mrf.mxu0
    %v747 = vadd.f32 0.0, %v746
    %v748 = vpop.f32.mrf.mxu0
    %v749 = vadd.f32 0.0, %v748
    %750 = vdwg.mxu0
    %751 = vrot.lane.b32.xlu0 %v747, 32
    %v752 = vpop.permute.xlu0 %751
    %753 = vrot.lane.b32.xlu0 %v749, 32
    %v754 = vpop.permute.xlu0 %753
    %v755 = vmax.f32 %v747, %v752
    %v756 = vmax.f32 %v749, %v754
    %757 = vrot.lane.b32.xlu0 %v755, 64
    %v758 = vpop.permute.xlu0 %757
    %759 = vrot.lane.b32.xlu0 %v756, 64
    %v760 = vpop.permute.xlu0 %759
    %v761 = vmax.f32 %v755, %v758
    %v762 = vmax.f32 %v756, %v760
    %v763 = vsub.f32 %v747, %v761
    %v764 = vsub.f32 %v749, %v762
    %v765 = vmul.f32 %v763, 1.442695
    %v766 = vpow.pop %v765
    %v767 = vmul.f32 %v764, 1.442695
    %v768 = vpow.pop %v767
    %v769 = vld [vmem:[%s10] sm:$0xf]
    %v770 = vld [vmem:[%s10 + $0x4] sm:$0xf]
    %v771 = vld [vmem:[%s10 + $0x8] sm:$0xf]
    %v772 = vld [vmem:[%s10 + $0xc] sm:$0xf]
    %v773 = vld [vmem:[%s10 + $0x10] sm:$0xf]
    %v774 = vld [vmem:[%s10 + $0x14] sm:$0xf]
    %v775 = vld [vmem:[%s10 + $0x18] sm:$0xf]
    %v776 = vld [vmem:[%s10 + $0x1c] sm:$0xf]
    %v777 = vld [vmem:[%s10 + $0x20] sm:$0xf]
    %v778 = vld [vmem:[%s10 + $0x24] sm:$0xf]
    %v779 = vld [vmem:[%s10 + $0x28] sm:$0xf]
    %v780 = vld [vmem:[%s10 + $0x2c] sm:$0xf]
    %v781 = vld [vmem:[%s10 + $0x30] sm:$0xf]
    %v782 = vld [vmem:[%s10 + $0x34] sm:$0xf]
    %v783 = vld [vmem:[%s10 + $0x38] sm:$0xf]
    %v784 = vld [vmem:[%s10 + $0x3c] sm:$0xf]
    %v785 = vpack.c.bf16 %v768, %v766
    %v802 = vunpack.c.l.b16 %v769
    %v803 = vunpack.c.l.b16 %v770
    %v804 = vunpack.c.l.b16 %v771
    %v805 = vunpack.c.l.b16 %v772
    %v806 = vunpack.c.l.b16 %v773
    %v807 = vunpack.c.l.b16 %v774
    %v808 = vunpack.c.l.b16 %v775
    %v809 = vunpack.c.l.b16 %v776
    %v810 = vunpack.c.l.b16 %v777
    %v811 = vunpack.c.l.b16 %v778
    %v812 = vunpack.c.l.b16 %v779
    %v813 = vunpack.c.l.b16 %v780
    %v814 = vunpack.c.l.b16 %v781
    %v815 = vunpack.c.l.b16 %v782
    %v816 = vunpack.c.l.b16 %v783
    %v817 = vunpack.c.l.b16 %v784
    %v818 = vpack.c.b16 %v803, %v802
    %v819 = vpack.c.b16 %v805, %v804
    %v820 = vpack.c.b16 %v807, %v806
    %v821 = vpack.c.b16 %v809, %v808
    %v822 = vpack.c.b16 %v811, %v810
    %v823 = vpack.c.b16 %v813, %v812
    %v824 = vpack.c.b16 %v815, %v814
    %v825 = vpack.c.b16 %v817, %v816
    %834 = vmatpush.bf16.msra.mxu0 %v825
    %835 = vmatpush.bf16.msra.mxu0 %v824
    %836 = vmatpush.bf16.msra.mxu0 %v823
    %837 = vmatpush.bf16.msra.mxu0 %v822
    %838 = vmatpush.bf16.msra.mxu0 %v821
    %839 = vmatpush.bf16.msra.mxu0 %v820
    %840 = vmatpush.bf16.msra.mxu0 %v819
    %841 = vmatpush.bf16.msra.mxu0 %v818
    %842 = vmatmul.bf16.gmra.mxu0 %v785
    %v843 = vpop.f32.mrf.mxu0
    %v844 = vadd.f32 0.0, %v843
    %v845 = vpop.f32.mrf.mxu0
    %v846 = vadd.f32 0.0, %v845
    %847 = vdwg.mxu0
    %v848 = vmul.f32 %v766, %v392
    %v849 = vmul.f32 %v768, %v394
    %v850 = vpack.c.bf16 %v849, %v848
    %851 = vmatpush.bf16.msra.mxu0 %v825
    %852 = vmatpush.bf16.msra.mxu0 %v824
    %853 = vmatpush.bf16.msra.mxu0 %v823
    %854 = vmatpush.bf16.msra.mxu0 %v822
    %855 = vmatpush.bf16.msra.mxu0 %v821
    %856 = vmatpush.bf16.msra.mxu0 %v820
    %857 = vmatpush.bf16.msra.mxu0 %v819
    %858 = vmatpush.bf16.msra.mxu0 %v818
    %859 = vmatmul.bf16.gmra.mxu0 %v850
    %v860 = vpop.f32.mrf.mxu0
    %v861 = vadd.f32 0.0, %v860
    %v862 = vpop.f32.mrf.mxu0
    %v863 = vadd.f32 0.0, %v862
    %864 = vdwg.mxu0
    %v865 = vrcp.pop %v844
    %v866 = vmul.f32 %v844, %v865
    %v867 = vsub.f32 1.0, %v866
    %v868 = vmul.f32 %v865, %v867
    %v869 = vadd.f32 %v865, %v868
    %vm870 = vweird.f32 %v844
    %vm871 = vweird.f32 %v865
    %vm872 = vmor %vm870, %vm871
    %v873 = vsel %vm872, %v865, %v869
    %v874 = vand.u32 2147483647, %v844
    %vm875 = vcmp.eq.f32.partialorder %v874, 8.507059e+37
    %v876 = vand.u32 %v844, 2147483648
    %v877 = vor.u32 1.1754944e-38, %v876
    %v878 = vsel %vm875, %v877, %v873
    %v879 = vrcp.pop %v846
    %v880 = vmul.f32 %v846, %v879
    %v881 = vsub.f32 1.0, %v880
    %v882 = vmul.f32 %v879, %v881
    %v883 = vadd.f32 %v879, %v882
    %vm884 = vweird.f32 %v846
    %vm885 = vweird.f32 %v879
    %vm886 = vmor %vm884, %vm885
    %v887 = vsel %vm886, %v879, %v883
    %v888 = vand.u32 2147483647, %v846
    %vm889 = vcmp.eq.f32.partialorder %v888, 8.507059e+37
    %v890 = vand.u32 %v846, 2147483648
    %v891 = vor.u32 1.1754944e-38, %v890
    %v892 = vsel %vm889, %v891, %v887
    %v893 = vmul.f32 %v861, %v878
    %v894 = vmul.f32 %v863, %v892
    %v895 = vmul.f32 %v641, %v406
    %v896 = vmul.f32 %v643, %v408
    %v897 = vpack.c.bf16 %v896, %v895
    %898 = vmatpush.bf16.msra.mxu0 %v728
    %899 = vmatpush.bf16.msra.mxu0 %v727
    %900 = vmatpush.bf16.msra.mxu0 %v726
    %901 = vmatpush.bf16.msra.mxu0 %v725
    %902 = vmatpush.bf16.msra.mxu0 %v724
    %903 = vmatpush.bf16.msra.mxu0 %v723
    %904 = vmatpush.bf16.msra.mxu0 %v722
    %905 = vmatpush.bf16.msra.mxu0 %v721
    %906 = vmatmul.bf16.gmra.mxu0 %v897
    %v907 = vpop.f32.mrf.mxu0
    %v908 = vadd.f32 0.0, %v907
    %v909 = vpop.f32.mrf.mxu0
    %v910 = vadd.f32 0.0, %v909
    %911 = vdwg.mxu0
    %912 = vrot.lane.b32.xlu0 %v908, 32
    %v913 = vpop.permute.xlu0 %912
    %914 = vrot.lane.b32.xlu0 %v910, 32
    %v915 = vpop.permute.xlu0 %914
    %v916 = vmax.f32 %v908, %v913
    %v917 = vmax.f32 %v910, %v915
    %918 = vrot.lane.b32.xlu0 %v916, 64
    %v919 = vpop.permute.xlu0 %918
    %920 = vrot.lane.b32.xlu0 %v917, 64
    %v921 = vpop.permute.xlu0 %920
    %v922 = vmax.f32 %v916, %v919
    %v923 = vmax.f32 %v917, %v921
    %v924 = vsub.f32 %v908, %v922
    %v925 = vsub.f32 %v910, %v923
    %v926 = vmul.f32 %v924, 1.442695
    %v927 = vpow.pop %v926
    %v928 = vmul.f32 %v925, 1.442695
    %v929 = vpow.pop %v928
    %v930 = vpack.c.bf16 %v929, %v927
    %931 = vmatpush.bf16.msra.mxu0 %v825
    %932 = vmatpush.bf16.msra.mxu0 %v824
    %933 = vmatpush.bf16.msra.mxu0 %v823
    %934 = vmatpush.bf16.msra.mxu0 %v822
    %935 = vmatpush.bf16.msra.mxu0 %v821
    %936 = vmatpush.bf16.msra.mxu0 %v820
    %937 = vmatpush.bf16.msra.mxu0 %v819
    %938 = vmatpush.bf16.msra.mxu0 %v818
    %939 = vmatmul.bf16.gmra.mxu0 %v930
    %v940 = vpop.f32.mrf.mxu0
    %v941 = vadd.f32 0.0, %v940
    %v942 = vpop.f32.mrf.mxu0
    %v943 = vadd.f32 0.0, %v942
    %944 = vdwg.mxu0
    %v945 = vmul.f32 %v927, %v420
    %v946 = vmul.f32 %v929, %v422
    %v947 = vpack.c.bf16 %v946, %v945
    %948 = vmatpush.bf16.msra.mxu0 %v825
    %949 = vmatpush.bf16.msra.mxu0 %v824
    %950 = vmatpush.bf16.msra.mxu0 %v823
    %951 = vmatpush.bf16.msra.mxu0 %v822
    %952 = vmatpush.bf16.msra.mxu0 %v821
    %953 = vmatpush.bf16.msra.mxu0 %v820
    %954 = vmatpush.bf16.msra.mxu0 %v819
    %955 = vmatpush.bf16.msra.mxu0 %v818
    %956 = vmatmul.bf16.gmra.mxu0 %v947
    %v957 = vpop.f32.mrf.mxu0
    %v958 = vadd.f32 0.0, %v957
    %v959 = vpop.f32.mrf.mxu0
    %v960 = vadd.f32 0.0, %v959
    %961 = vdwg.mxu0
    %v962 = vrcp.pop %v941
    %v963 = vmul.f32 %v941, %v962
    %v964 = vsub.f32 1.0, %v963
    %v965 = vmul.f32 %v962, %v964
    %v966 = vadd.f32 %v962, %v965
    %vm967 = vweird.f32 %v941
    %vm968 = vweird.f32 %v962
    %vm969 = vmor %vm967, %vm968
    %v970 = vsel %vm969, %v962, %v966
    %v971 = vand.u32 2147483647, %v941
    %vm972 = vcmp.eq.f32.partialorder %v971, 8.507059e+37
    %v973 = vand.u32 %v941, 2147483648
    %v974 = vor.u32 1.1754944e-38, %v973
    %v975 = vsel %vm972, %v974, %v970
    %v976 = vrcp.pop %v943
    %v977 = vmul.f32 %v943, %v976
    %v978 = vsub.f32 1.0, %v977
    %v979 = vmul.f32 %v976, %v978
    %v980 = vadd.f32 %v976, %v979
    %vm981 = vweird.f32 %v943
    %vm982 = vweird.f32 %v976
    %vm983 = vmor %vm981, %vm982
    %v984 = vsel %vm983, %v976, %v980
    %v985 = vand.u32 2147483647, %v943
    %vm986 = vcmp.eq.f32.partialorder %v985, 8.507059e+37
    %v987 = vand.u32 %v943, 2147483648
    %v988 = vor.u32 1.1754944e-38, %v987
    %v989 = vsel %vm986, %v988, %v984
    %v990 = vmul.f32 %v958, %v975
    %v991 = vmul.f32 %v960, %v989
    %v992 = vadd.f32 %v893, %v990
    %v993 = vadd.f32 %v894, %v991
    %v994 = vadd.f32 %v992, %v234
    %v995 = vadd.f32 %v993, %v235
    %v996 = vmul.f32 %v538, %v552
    %v997 = vmul.f32 %v540, %v554
    %v998 = vpack.c.bf16 %v997, %v996
    %999 = vmatpush.bf16.msra.mxu0 %v728
    %1000 = vmatpush.bf16.msra.mxu0 %v727
    %1001 = vmatpush.bf16.msra.mxu0 %v726
    %1002 = vmatpush.bf16.msra.mxu0 %v725
    %1003 = vmatpush.bf16.msra.mxu0 %v724
    %1004 = vmatpush.bf16.msra.mxu0 %v723
    %1005 = vmatpush.bf16.msra.mxu0 %v722
    %1006 = vmatpush.bf16.msra.mxu0 %v721
    %1007 = vmatmul.bf16.gmra.mxu0 %v998
    %v1008 = vpop.f32.mrf.mxu0
    %v1009 = vadd.f32 0.0, %v1008
    %v1010 = vpop.f32.mrf.mxu0
    %v1011 = vadd.f32 0.0, %v1010
    %1012 = vdwg.mxu0
    %1013 = vrot.lane.b32.xlu0 %v1009, 32
    %v1014 = vpop.permute.xlu0 %1013
    %1015 = vrot.lane.b32.xlu0 %v1011, 32
    %v1016 = vpop.permute.xlu0 %1015
    %v1017 = vmax.f32 %v1009, %v1014
    %v1018 = vmax.f32 %v1011, %v1016
    %1019 = vrot.lane.b32.xlu0 %v1017, 64
    %v1020 = vpop.permute.xlu0 %1019
    %1021 = vrot.lane.b32.xlu0 %v1018, 64
    %v1022 = vpop.permute.xlu0 %1021
    %v1023 = vmax.f32 %v1017, %v1020
    %v1024 = vmax.f32 %v1018, %v1022
    %v1025 = vsub.f32 %v1009, %v1023
    %v1026 = vsub.f32 %v1011, %v1024
    %v1027 = vmul.f32 %v1025, 1.442695
    %v1028 = vpow.pop %v1027
    %v1029 = vmul.f32 %v1026, 1.442695
    %v1030 = vpow.pop %v1029
    %v1031 = vpack.c.bf16 %v1030, %v1028
    %1032 = vmatpush.bf16.msra.mxu0 %v825
    %1033 = vmatpush.bf16.msra.mxu0 %v824
    %1034 = vmatpush.bf16.msra.mxu0 %v823
    %1035 = vmatpush.bf16.msra.mxu0 %v822
    %1036 = vmatpush.bf16.msra.mxu0 %v821
    %1037 = vmatpush.bf16.msra.mxu0 %v820
    %1038 = vmatpush.bf16.msra.mxu0 %v819
    %1039 = vmatpush.bf16.msra.mxu0 %v818
    %1040 = vmatmul.bf16.gmra.mxu0 %v1031
    %v1041 = vpop.f32.mrf.mxu0
    %v1042 = vadd.f32 0.0, %v1041
    %v1043 = vpop.f32.mrf.mxu0
    %v1044 = vadd.f32 0.0, %v1043
    %1045 = vdwg.mxu0
    %v1046 = vmul.f32 %v1028, %v566
    %v1047 = vmul.f32 %v1030, %v568
    %v1048 = vpack.c.bf16 %v1047, %v1046
    %1049 = vmatpush.bf16.msra.mxu0 %v825
    %1050 = vmatpush.bf16.msra.mxu0 %v824
    %1051 = vmatpush.bf16.msra.mxu0 %v823
    %1052 = vmatpush.bf16.msra.mxu0 %v822
    %1053 = vmatpush.bf16.msra.mxu0 %v821
    %1054 = vmatpush.bf16.msra.mxu0 %v820
    %1055 = vmatpush.bf16.msra.mxu0 %v819
    %1056 = vmatpush.bf16.msra.mxu0 %v818
    %1057 = vmatmul.bf16.gmra.mxu0 %v1048
    %v1058 = vpop.f32.mrf.mxu0
    %v1059 = vadd.f32 0.0, %v1058
    %v1060 = vpop.f32.mrf.mxu0
    %v1061 = vadd.f32 0.0, %v1060
    %1062 = vdwg.mxu0
    %v1063 = vrcp.pop %v1042
    %v1064 = vmul.f32 %v1042, %v1063
    %v1065 = vsub.f32 1.0, %v1064
    %v1066 = vmul.f32 %v1063, %v1065
    %v1067 = vadd.f32 %v1063, %v1066
    %vm1068 = vweird.f32 %v1042
    %vm1069 = vweird.f32 %v1063
    %vm1070 = vmor %vm1068, %vm1069
    %v1071 = vsel %vm1070, %v1063, %v1067
    %v1072 = vand.u32 2147483647, %v1042
    %vm1073 = vcmp.eq.f32.partialorder %v1072, 8.507059e+37
    %v1074 = vand.u32 %v1042, 2147483648
    %v1075 = vor.u32 1.1754944e-38, %v1074
    %v1076 = vsel %vm1073, %v1075, %v1071
    %v1077 = vrcp.pop %v1044
    %v1078 = vmul.f32 %v1044, %v1077
    %v1079 = vsub.f32 1.0, %v1078
    %v1080 = vmul.f32 %v1077, %v1079
    %v1081 = vadd.f32 %v1077, %v1080
    %vm1082 = vweird.f32 %v1044
    %vm1083 = vweird.f32 %v1077
    %vm1084 = vmor %vm1082, %vm1083
    %v1085 = vsel %vm1084, %v1077, %v1081
    %v1086 = vand.u32 2147483647, %v1044
    %vm1087 = vcmp.eq.f32.partialorder %v1086, 8.507059e+37
    %v1088 = vand.u32 %v1044, 2147483648
    %v1089 = vor.u32 1.1754944e-38, %v1088
    %v1090 = vsel %vm1087, %v1089, %v1085
    %v1091 = vmul.f32 %v1059, %v1076
    %v1092 = vmul.f32 %v1061, %v1090
    %v1093 = vmul.f32 %v666, %v580
    %v1094 = vmul.f32 %v668, %v582
    %v1095 = vpack.c.bf16 %v1094, %v1093
    %1096 = vmatpush.bf16.msra.mxu0 %v728
    %1097 = vmatpush.bf16.msra.mxu0 %v727
    %1098 = vmatpush.bf16.msra.mxu0 %v726
    %1099 = vmatpush.bf16.msra.mxu0 %v725
    %1100 = vmatpush.bf16.msra.mxu0 %v724
    %1101 = vmatpush.bf16.msra.mxu0 %v723
    %1102 = vmatpush.bf16.msra.mxu0 %v722
    %1103 = vmatpush.bf16.msra.mxu0 %v721
    %1104 = vmatmul.bf16.gmra.mxu0 %v1095
    %v1105 = vpop.f32.mrf.mxu0
    %v1106 = vadd.f32 0.0, %v1105
    %v1107 = vpop.f32.mrf.mxu0
    %v1108 = vadd.f32 0.0, %v1107
    %1109 = vdwg.mxu0
    %1110 = vrot.lane.b32.xlu0 %v1106, 32
    %v1111 = vpop.permute.xlu0 %1110
    %1112 = vrot.lane.b32.xlu0 %v1108, 32
    %v1113 = vpop.permute.xlu0 %1112
    %v1114 = vmax.f32 %v1106, %v1111
    %v1115 = vmax.f32 %v1108, %v1113
    %1116 = vrot.lane.b32.xlu0 %v1114, 64
    %v1117 = vpop.permute.xlu0 %1116
    %1118 = vrot.lane.b32.xlu0 %v1115, 64
    %v1119 = vpop.permute.xlu0 %1118
    %v1120 = vmax.f32 %v1114, %v1117
    %v1121 = vmax.f32 %v1115, %v1119
    %v1122 = vsub.f32 %v1106, %v1120
    %v1123 = vsub.f32 %v1108, %v1121
    %v1124 = vmul.f32 %v1122, 1.442695
    %v1125 = vpow.pop %v1124
    %v1126 = vmul.f32 %v1123, 1.442695
    %v1127 = vpow.pop %v1126
    %v1128 = vpack.c.bf16 %v1127, %v1125
    %1129 = vmatpush.bf16.msra.mxu0 %v825
    %1130 = vmatpush.bf16.msra.mxu0 %v824
    %1131 = vmatpush.bf16.msra.mxu0 %v823
    %1132 = vmatpush.bf16.msra.mxu0 %v822
    %1133 = vmatpush.bf16.msra.mxu0 %v821
    %1134 = vmatpush.bf16.msra.mxu0 %v820
    %1135 = vmatpush.bf16.msra.mxu0 %v819
    %1136 = vmatpush.bf16.msra.mxu0 %v818
    %1137 = vmatmul.bf16.gmra.mxu0 %v1128
    %v1138 = vpop.f32.mrf.mxu0
    %v1139 = vadd.f32 0.0, %v1138
    %v1140 = vpop.f32.mrf.mxu0
    %v1141 = vadd.f32 0.0, %v1140
    %1142 = vdwg.mxu0
    %v1143 = vmul.f32 %v1125, %v594
    %v1144 = vmul.f32 %v1127, %v596
    %v1145 = vpack.c.bf16 %v1144, %v1143
    %1146 = vmatpush.bf16.msra.mxu0 %v825
    %1147 = vmatpush.bf16.msra.mxu0 %v824
    %1148 = vmatpush.bf16.msra.mxu0 %v823
    %1149 = vmatpush.bf16.msra.mxu0 %v822
    %1150 = vmatpush.bf16.msra.mxu0 %v821
    %1151 = vmatpush.bf16.msra.mxu0 %v820
    %1152 = vmatpush.bf16.msra.mxu0 %v819
    %1153 = vmatpush.bf16.msra.mxu0 %v818
    %1154 = vmatmul.bf16.gmra.mxu0 %v1145
    %v1155 = vpop.f32.mrf.mxu0
    %v1156 = vadd.f32 0.0, %v1155
    %v1157 = vpop.f32.mrf.mxu0
    %v1158 = vadd.f32 0.0, %v1157
    %1159 = vdwg.mxu0
    %v1160 = vrcp.pop %v1139
    %v1161 = vmul.f32 %v1139, %v1160
    %v1162 = vsub.f32 1.0, %v1161
    %v1163 = vmul.f32 %v1160, %v1162
    %v1164 = vadd.f32 %v1160, %v1163
    %vm1165 = vweird.f32 %v1139
    %vm1166 = vweird.f32 %v1160
    %vm1167 = vmor %vm1165, %vm1166
    %v1168 = vsel %vm1167, %v1160, %v1164
    %v1169 = vand.u32 2147483647, %v1139
    %vm1170 = vcmp.eq.f32.partialorder %v1169, 8.507059e+37
    %v1171 = vand.u32 %v1139, 2147483648
    %v1172 = vor.u32 1.1754944e-38, %v1171
    %v1173 = vsel %vm1170, %v1172, %v1168
    %v1174 = vrcp.pop %v1141
    %v1175 = vmul.f32 %v1141, %v1174
    %v1176 = vsub.f32 1.0, %v1175
    %v1177 = vmul.f32 %v1174, %v1176
    %v1178 = vadd.f32 %v1174, %v1177
    %vm1179 = vweird.f32 %v1141
    %vm1180 = vweird.f32 %v1174
    %vm1181 = vmor %vm1179, %vm1180
    %v1182 = vsel %vm1181, %v1174, %v1178
    %v1183 = vand.u32 2147483647, %v1141
    %vm1184 = vcmp.eq.f32.partialorder %v1183, 8.507059e+37
    %v1185 = vand.u32 %v1141, 2147483648
    %v1186 = vor.u32 1.1754944e-38, %v1185
    %v1187 = vsel %vm1184, %v1186, %v1182
    %v1188 = vmul.f32 %v1156, %v1173
    %v1189 = vmul.f32 %v1158, %v1187
    %v1190 = vadd.f32 %v1091, %v1188
    %v1191 = vadd.f32 %v1092, %v1189
    %v1192 = vadd.f32 %v1190, %v276
    %v1193 = vadd.f32 %v1191, %v277
    %v1194 = vld [vmem:[%s11] sm:$0x1]
    %v1195 = vmul.f32 %v994, %v994
    %v1196 = vmul.f32 %v995, %v995
    %v1197 = vsel %vm189, %v1195, 0.0
    %1198 = vadd.xlane.f32.xlu0 %v1197
    %v1199 = vpop.xlane.xlu0 %1198
    %v1200 = vsel %vm189, %v1196, 0.0
    %1201 = vadd.xlane.f32.xlu0 %v1200
    %v1202 = vpop.xlane.xlu0 %1201
    %v1203 = vmul.f32 %v1199, %v202
    %v1204 = vmul.f32 %v1202, %v202
    %v1205 = vadd.f32 %v1203, 1.1920929e-07
    %v1206 = vadd.f32 %v1204, 1.1920929e-07
    %v1207 = vrsqrt.pop %v1205
    %v1208 = vmul.f32 %v1207, %v1205
    %v1209 = vmul.f32 %v1208, %v1207
    %v1210 = vmul.f32 0.5, %v1209
    %v1211 = vsub.f32 1.5, %v1210
    %v1212 = vmul.f32 %v1207, %v1211
    %vm1213 = vweird.f32 %v1205
    %vm1214 = vweird.f32 %v1207
    %vm1215 = vmor %vm1213, %vm1214
    %v1216 = vsel %vm1215, %v1207, %v1212
    %v1217 = vrsqrt.pop %v1206
    %v1218 = vmul.f32 %v1217, %v1206
    %v1219 = vmul.f32 %v1218, %v1217
    %v1220 = vmul.f32 0.5, %v1219
    %v1221 = vsub.f32 1.5, %v1220
    %v1222 = vmul.f32 %v1217, %v1221
    %vm1223 = vweird.f32 %v1206
    %vm1224 = vweird.f32 %v1217
    %vm1225 = vmor %vm1223, %vm1224
    %v1226 = vsel %vm1225, %v1217, %v1222
    %v1227 = vmul.f32 %v994, %v1216
    %v1228 = vmul.f32 %v995, %v1226
    %v1230 = vperm.slane %v1194, 0
    %v1232 = vmul.f32 %v1227, %v1230
    %v1233 = vmul.f32 %v1228, %v1230
    %v1234 = vld [vmem:[#allocation11] sm:$0xf]
    %v1235 = vld [vmem:[#allocation11 + $0x4] sm:$0xf]
    %v1236 = vld [vmem:[#allocation11 + $0x8] sm:$0xf]
    %v1237 = vld [vmem:[#allocation11 + $0xc] sm:$0xf]
    %v1238 = vpack.c.bf16 %v1233, %v1232
    %v1239 = vld [vmem:[%s14] sm:$0x1]
    %v1241 = vperm.slane %v1239, 0
    %v1247 = vunpack.c.l.b16 %v1234
    %v1248 = vunpack.c.l.b16 %v1235
    %v1249 = vunpack.c.l.b16 %v1236
    %v1250 = vunpack.c.l.b16 %v1237
    %v1251 = vpack.c.b16 %v1248, %v1247
    %v1252 = vpack.c.b16 %v1250, %v1249
    %v1256 = vsel %vm189, %v1238, 0
    %1258 = vmatpush.bf16.msra.mxu0 0
    %1259 = vmatpush.bf16.msra.mxu0 0
    %1260 = vmatpush.bf16.msra.mxu0 0
    %1261 = vmatpush.bf16.msra.mxu0 0
    %1262 = vmatpush.bf16.msra.mxu0 0
    %1263 = vmatpush.bf16.msra.mxu0 0
    %1264 = vmatpush.bf16.msra.mxu0 %v1252
    %1265 = vmatpush.bf16.msra.mxu0 %v1251
    %1266 = vmatmul.bf16.gmra.mxu0 %v1256
    %v1267 = vpop.f32.mrf.mxu0
    %v1268 = vadd.f32 %v1241, %v1267
    %v1269 = vpop.f32.mrf.mxu0
    %v1270 = vadd.f32 %v1241, %v1269
    %1271 = vdwg.mxu0
    %v1272 = vmul.f32 %v1268, 0.5
    %v1273 = vmul.f32 %v1270, 0.5
    %v1274 = vmul.f32 %v1268, 0.70710677
    %v1275 = vmul.f32 %v1270, 0.70710677
    %v1276 = vmul.f32 %v1274, %v1274
    %v1277 = vmin.f32 16.0, %v1276
    %v1278 = vmul.f32 %v1277, 2.1237322e-06
    %v1279 = vadd.f32 %v1278, 0.00028619796
    %v1280 = vmul.f32 %v1277, %v1279
    %v1281 = vadd.f32 %v1280, 0.0036580483
    %v1282 = vmul.f32 %v1277, %v1281
    %v1283 = vadd.f32 %v1282, 0.05243302
    %v1284 = vmul.f32 %v1277, %v1283
    %v1285 = vadd.f32 %v1284, 0.18741608
    %v1286 = vmul.f32 %v1277, %v1285
    %v1287 = vadd.f32 %v1286, 1.1283791
    %v1288 = vmul.f32 %v1274, %v1287
    %v1289 = vmul.f32 %v1277, 3.8918573e-05
    %v1290 = vadd.f32 %v1289, 0.001143296
    %v1291 = vmul.f32 %v1277, %v1290
    %v1292 = vadd.f32 %v1291, 0.014752088
    %v1293 = vmul.f32 %v1277, %v1292
    %v1294 = vadd.f32 %v1293, 0.112945676
    %v1295 = vmul.f32 %v1277, %v1294
    %v1296 = vadd.f32 %v1295, 0.4994258
    %v1297 = vmul.f32 %v1277, %v1296
    %v1298 = vadd.f32 %v1297, 1.0
    %v1299 = vrcp.pop %v1298
    %v1300 = vmul.f32 %v1298, %v1299
    %v1301 = vsub.f32 1.0, %v1300
    %v1302 = vmul.f32 %v1299, %v1301
    %v1303 = vadd.f32 %v1299, %v1302
    %vm1304 = vweird.f32 %v1298
    %vm1305 = vweird.f32 %v1299
    %vm1306 = vmor %vm1304, %vm1305
    %v1307 = vsel %vm1306, %v1299, %v1303
    %v1308 = vand.u32 2147483647, %v1298
    %vm1309 = vcmp.eq.f32.partialorder %v1308, 8.507059e+37
    %v1310 = vand.u32 %v1298, 2147483648
    %v1311 = vor.u32 1.1754944e-38, %v1310
    %v1312 = vsel %vm1309, %v1311, %v1307
    %v1313 = vmul.f32 %v1288, %v1312
    %v1314 = vmin.f32 %v1313, 1.0
    %v1315 = vmax.f32 %v1314, -1.0
    %v1316 = vmul.f32 %v1275, %v1275
    %v1317 = vmin.f32 16.0, %v1316
    %v1318 = vmul.f32 %v1317, 2.1237322e-06
    %v1319 = vadd.f32 %v1318, 0.00028619796
    %v1320 = vmul.f32 %v1317, %v1319
    %v1321 = vadd.f32 %v1320, 0.0036580483
    %v1322 = vmul.f32 %v1317, %v1321
    %v1323 = vadd.f32 %v1322, 0.05243302
    %v1324 = vmul.f32 %v1317, %v1323
    %v1325 = vadd.f32 %v1324, 0.18741608
    %v1326 = vmul.f32 %v1317, %v1325
    %v1327 = vadd.f32 %v1326, 1.1283791
    %v1328 = vmul.f32 %v1275, %v1327
    %v1329 = vmul.f32 %v1317, 3.8918573e-05
    %v1330 = vadd.f32 %v1329, 0.001143296
    %v1331 = vmul.f32 %v1317, %v1330
    %v1332 = vadd.f32 %v1331, 0.014752088
    %v1333 = vmul.f32 %v1317, %v1332
    %v1334 = vadd.f32 %v1333, 0.112945676
    %v1335 = vmul.f32 %v1317, %v1334
    %v1336 = vadd.f32 %v1335, 0.4994258
    %v1337 = vmul.f32 %v1317, %v1336
    %v1338 = vadd.f32 %v1337, 1.0
    %v1339 = vrcp.pop %v1338
    %v1340 = vmul.f32 %v1338, %v1339
    %v1341 = vsub.f32 1.0, %v1340
    %v1342 = vmul.f32 %v1339, %v1341
    %v1343 = vadd.f32 %v1339, %v1342
    %vm1344 = vweird.f32 %v1338
    %vm1345 = vweird.f32 %v1339
    %vm1346 = vmor %vm1344, %vm1345
    %v1347 = vsel %vm1346, %v1339, %v1343
    %v1348 = vand.u32 2147483647, %v1338
    %vm1349 = vcmp.eq.f32.partialorder %v1348, 8.507059e+37
    %v1350 = vand.u32 %v1338, 2147483648
    %v1351 = vor.u32 1.1754944e-38, %v1350
    %v1352 = vsel %vm1349, %v1351, %v1347
    %v1353 = vmul.f32 %v1328, %v1352
    %v1354 = vmin.f32 %v1353, 1.0
    %v1355 = vmax.f32 %v1354, -1.0
    %v1356 = vadd.f32 %v1315, 1.0
    %v1357 = vadd.f32 %v1355, 1.0
    %v1358 = vmul.f32 %v1272, %v1356
    %v1359 = vmul.f32 %v1273, %v1357
    %v1360 = vld [vmem:[%s15] sm:$0xf]
    %v1361 = vld [vmem:[%s15 + $0x4] sm:$0xf]
    %v1362 = vld [vmem:[%s15 + $0x8] sm:$0xf]
    %v1363 = vld [vmem:[%s15 + $0xc] sm:$0xf]
    %v1364 = vld [vmem:[%s15 + $0x10] sm:$0xf]
    %v1365 = vld [vmem:[%s15 + $0x14] sm:$0xf]
    %v1366 = vld [vmem:[%s15 + $0x18] sm:$0xf]
    %v1367 = vld [vmem:[%s15 + $0x1c] sm:$0xf]
    %v1368 = vld [vmem:[%s15 + $0x20] sm:$0xf]
    %v1369 = vld [vmem:[%s15 + $0x24] sm:$0xf]
    %v1370 = vld [vmem:[%s15 + $0x28] sm:$0xf]
    %v1371 = vld [vmem:[%s15 + $0x2c] sm:$0xf]
    %v1372 = vld [vmem:[%s15 + $0x30] sm:$0xf]
    %v1373 = vld [vmem:[%s15 + $0x34] sm:$0xf]
    %v1374 = vld [vmem:[%s15 + $0x38] sm:$0xf]
    %v1375 = vld [vmem:[%s15 + $0x3c] sm:$0xf]
    %v1376 = vpack.c.bf16 %v1359, %v1358
    %v1377 = vld [vmem:[%s16] sm:$0x1]
    %v1379 = vperm.slane %v1377, 0
    %v1397 = vunpack.c.l.b16 %v1360
    %v1398 = vunpack.c.l.b16 %v1361
    %v1399 = vunpack.c.l.b16 %v1362
    %v1400 = vunpack.c.l.b16 %v1363
    %v1401 = vunpack.c.l.b16 %v1364
    %v1402 = vunpack.c.l.b16 %v1365
    %v1403 = vunpack.c.l.b16 %v1366
    %v1404 = vunpack.c.l.b16 %v1367
    %v1405 = vunpack.c.l.b16 %v1368
    %v1406 = vunpack.c.l.b16 %v1369
    %v1407 = vunpack.c.l.b16 %v1370
    %v1408 = vunpack.c.l.b16 %v1371
    %v1409 = vunpack.c.l.b16 %v1372
    %v1410 = vunpack.c.l.b16 %v1373
    %v1411 = vunpack.c.l.b16 %v1374
    %v1412 = vunpack.c.l.b16 %v1375
    %v1413 = vpack.c.b16 %v1398, %v1397
    %v1414 = vpack.c.b16 %v1400, %v1399
    %v1415 = vpack.c.b16 %v1402, %v1401
    %v1416 = vpack.c.b16 %v1404, %v1403
    %v1417 = vpack.c.b16 %v1406, %v1405
    %v1418 = vpack.c.b16 %v1408, %v1407
    %v1419 = vpack.c.b16 %v1410, %v1409
    %v1420 = vpack.c.b16 %v1412, %v1411
    %1429 = vmatpush.bf16.msra.mxu0 %v1420
    %1430 = vmatpush.bf16.msra.mxu0 %v1419
    %1431 = vmatpush.bf16.msra.mxu0 %v1418
    %1432 = vmatpush.bf16.msra.mxu0 %v1417
    %1433 = vmatpush.bf16.msra.mxu0 %v1416
    %1434 = vmatpush.bf16.msra.mxu0 %v1415
    %1435 = vmatpush.bf16.msra.mxu0 %v1414
    %1436 = vmatpush.bf16.msra.mxu0 %v1413
    %1437 = vmatmul.bf16.gmra.mxu0 %v1376
    %v1438 = vpop.f32.mrf.mxu0
    %v1439 = vadd.f32 %v1379, %v1438
    %v1440 = vpop.f32.mrf.mxu0
    %v1441 = vadd.f32 %v1379, %v1440
    %1442 = vdwg.mxu0
    %v1443 = vadd.f32 %v1439, %v994
    %v1444 = vadd.f32 %v1441, %v995
    %1445 = vst.msk [vmem:[#allocation14] sm:$0xff] %vm189, %v1443
    %1446 = vst.msk [vmem:[#allocation14 + $0x8] sm:$0xff] %vm189, %v1444
    %v1447 = vld [vmem:[%s12] sm:$0x1]
    %v1448 = vmul.f32 %v1192, %v1192
    %v1449 = vmul.f32 %v1193, %v1193
    %v1450 = vsel %vm189, %v1448, 0.0
    %1451 = vadd.xlane.f32.xlu0 %v1450
    %v1452 = vpop.xlane.xlu0 %1451
    %v1453 = vsel %vm189, %v1449, 0.0
    %1454 = vadd.xlane.f32.xlu0 %v1453
    %v1455 = vpop.xlane.xlu0 %1454
    %v1456 = vmul.f32 %v1452, %v202
    %v1457 = vmul.f32 %v1455, %v202
    %v1458 = vadd.f32 %v1456, 1.1920929e-07
    %v1459 = vadd.f32 %v1457, 1.1920929e-07
    %v1460 = vrsqrt.pop %v1458
    %v1461 = vmul.f32 %v1460, %v1458
    %v1462 = vmul.f32 %v1461, %v1460
    %v1463 = vmul.f32 0.5, %v1462
    %v1464 = vsub.f32 1.5, %v1463
    %v1465 = vmul.f32 %v1460, %v1464
    %vm1466 = vweird.f32 %v1458
    %vm1467 = vweird.f32 %v1460
    %vm1468 = vmor %vm1466, %vm1467
    %v1469 = vsel %vm1468, %v1460, %v1465
    %v1470 = vrsqrt.pop %v1459
    %v1471 = vmul.f32 %v1470, %v1459
    %v1472 = vmul.f32 %v1471, %v1470
    %v1473 = vmul.f32 0.5, %v1472
    %v1474 = vsub.f32 1.5, %v1473
    %v1475 = vmul.f32 %v1470, %v1474
    %vm1476 = vweird.f32 %v1459
    %vm1477 = vweird.f32 %v1470
    %vm1478 = vmor %vm1476, %vm1477
    %v1479 = vsel %vm1478, %v1470, %v1475
    %v1480 = vmul.f32 %v1192, %v1469
    %v1481 = vmul.f32 %v1193, %v1479
    %v1483 = vperm.slane %v1447, 0
    %v1485 = vmul.f32 %v1480, %v1483
    %v1486 = vmul.f32 %v1481, %v1483
    %v1487 = vld [vmem:[#allocation13] sm:$0xf]
    %v1488 = vld [vmem:[#allocation13 + $0x4] sm:$0xf]
    %v1489 = vld [vmem:[#allocation13 + $0x8] sm:$0xf]
    %v1490 = vld [vmem:[#allocation13 + $0xc] sm:$0xf]
    %v1491 = vpack.c.bf16 %v1486, %v1485
    %v1492 = vld [vmem:[%s18] sm:$0x1]
    %v1494 = vperm.slane %v1492, 0
    %v1500 = vunpack.c.l.b16 %v1487
    %v1501 = vunpack.c.l.b16 %v1488
    %v1502 = vunpack.c.l.b16 %v1489
    %v1503 = vunpack.c.l.b16 %v1490
    %v1504 = vpack.c.b16 %v1501, %v1500
    %v1505 = vpack.c.b16 %v1503, %v1502
    %v1509 = vsel %vm189, %v1491, 0
    %1511 = vmatpush.bf16.msra.mxu0 0
    %1512 = vmatpush.bf16.msra.mxu0 0
    %1513 = vmatpush.bf16.msra.mxu0 0
    %1514 = vmatpush.bf16.msra.mxu0 0
    %1515 = vmatpush.bf16.msra.mxu0 0
    %1516 = vmatpush.bf16.msra.mxu0 0
    %1517 = vmatpush.bf16.msra.mxu0 %v1505
    %1518 = vmatpush.bf16.msra.mxu0 %v1504
    %1519 = vmatmul.bf16.gmra.mxu0 %v1509
    %v1520 = vpop.f32.mrf.mxu0
    %v1521 = vadd.f32 %v1494, %v1520
    %v1522 = vpop.f32.mrf.mxu0
    %v1523 = vadd.f32 %v1494, %v1522
    %1524 = vdwg.mxu0
    %v1525 = vmul.f32 %v1521, 0.5
    %v1526 = vmul.f32 %v1523, 0.5
    %v1527 = vmul.f32 %v1521, 0.70710677
    %v1528 = vmul.f32 %v1523, 0.70710677
    %v1529 = vmul.f32 %v1527, %v1527
    %v1530 = vmin.f32 16.0, %v1529
    %v1531 = vmul.f32 %v1530, 2.1237322e-06
    %v1532 = vadd.f32 %v1531, 0.00028619796
    %v1533 = vmul.f32 %v1530, %v1532
    %v1534 = vadd.f32 %v1533, 0.0036580483
    %v1535 = vmul.f32 %v1530, %v1534
    %v1536 = vadd.f32 %v1535, 0.05243302
    %v1537 = vmul.f32 %v1530, %v1536
    %v1538 = vadd.f32 %v1537, 0.18741608
    %v1539 = vmul.f32 %v1530, %v1538
    %v1540 = vadd.f32 %v1539, 1.1283791
    %v1541 = vmul.f32 %v1527, %v1540
    %v1542 = vmul.f32 %v1530, 3.8918573e-05
    %v1543 = vadd.f32 %v1542, 0.001143296
    %v1544 = vmul.f32 %v1530, %v1543
    %v1545 = vadd.f32 %v1544, 0.014752088
    %v1546 = vmul.f32 %v1530, %v1545
    %v1547 = vadd.f32 %v1546, 0.112945676
    %v1548 = vmul.f32 %v1530, %v1547
    %v1549 = vadd.f32 %v1548, 0.4994258
    %v1550 = vmul.f32 %v1530, %v1549
    %v1551 = vadd.f32 %v1550, 1.0
    %v1552 = vrcp.pop %v1551
    %v1553 = vmul.f32 %v1551, %v1552
    %v1554 = vsub.f32 1.0, %v1553
    %v1555 = vmul.f32 %v1552, %v1554
    %v1556 = vadd.f32 %v1552, %v1555
    %vm1557 = vweird.f32 %v1551
    %vm1558 = vweird.f32 %v1552
    %vm1559 = vmor %vm1557, %vm1558
    %v1560 = vsel %vm1559, %v1552, %v1556
    %v1561 = vand.u32 2147483647, %v1551
    %vm1562 = vcmp.eq.f32.partialorder %v1561, 8.507059e+37
    %v1563 = vand.u32 %v1551, 2147483648
    %v1564 = vor.u32 1.1754944e-38, %v1563
    %v1565 = vsel %vm1562, %v1564, %v1560
    %v1566 = vmul.f32 %v1541, %v1565
    %v1567 = vmin.f32 %v1566, 1.0
    %v1568 = vmax.f32 %v1567, -1.0
    %v1569 = vmul.f32 %v1528, %v1528
    %v1570 = vmin.f32 16.0, %v1569
    %v1571 = vmul.f32 %v1570, 2.1237322e-06
    %v1572 = vadd.f32 %v1571, 0.00028619796
    %v1573 = vmul.f32 %v1570, %v1572
    %v1574 = vadd.f32 %v1573, 0.0036580483
    %v1575 = vmul.f32 %v1570, %v1574
    %v1576 = vadd.f32 %v1575, 0.05243302
    %v1577 = vmul.f32 %v1570, %v1576
    %v1578 = vadd.f32 %v1577, 0.18741608
    %v1579 = vmul.f32 %v1570, %v1578
    %v1580 = vadd.f32 %v1579, 1.1283791
    %v1581 = vmul.f32 %v1528, %v1580
    %v1582 = vmul.f32 %v1570, 3.8918573e-05
    %v1583 = vadd.f32 %v1582, 0.001143296
    %v1584 = vmul.f32 %v1570, %v1583
    %v1585 = vadd.f32 %v1584, 0.014752088
    %v1586 = vmul.f32 %v1570, %v1585
    %v1587 = vadd.f32 %v1586, 0.112945676
    %v1588 = vmul.f32 %v1570, %v1587
    %v1589 = vadd.f32 %v1588, 0.4994258
    %v1590 = vmul.f32 %v1570, %v1589
    %v1591 = vadd.f32 %v1590, 1.0
    %v1592 = vrcp.pop %v1591
    %v1593 = vmul.f32 %v1591, %v1592
    %v1594 = vsub.f32 1.0, %v1593
    %v1595 = vmul.f32 %v1592, %v1594
    %v1596 = vadd.f32 %v1592, %v1595
    %vm1597 = vweird.f32 %v1591
    %vm1598 = vweird.f32 %v1592
    %vm1599 = vmor %vm1597, %vm1598
    %v1600 = vsel %vm1599, %v1592, %v1596
    %v1601 = vand.u32 2147483647, %v1591
    %vm1602 = vcmp.eq.f32.partialorder %v1601, 8.507059e+37
    %v1603 = vand.u32 %v1591, 2147483648
    %v1604 = vor.u32 1.1754944e-38, %v1603
    %v1605 = vsel %vm1602, %v1604, %v1600
    %v1606 = vmul.f32 %v1581, %v1605
    %v1607 = vmin.f32 %v1606, 1.0
    %v1608 = vmax.f32 %v1607, -1.0
    %v1609 = vadd.f32 %v1568, 1.0
    %v1610 = vadd.f32 %v1608, 1.0
    %v1611 = vmul.f32 %v1525, %v1609
    %v1612 = vmul.f32 %v1526, %v1610
    %v1613 = vld [vmem:[%s19] sm:$0xf]
    %v1614 = vld [vmem:[%s19 + $0x4] sm:$0xf]
    %v1615 = vld [vmem:[%s19 + $0x8] sm:$0xf]
    %v1616 = vld [vmem:[%s19 + $0xc] sm:$0xf]
    %v1617 = vld [vmem:[%s19 + $0x10] sm:$0xf]
    %v1618 = vld [vmem:[%s19 + $0x14] sm:$0xf]
    %v1619 = vld [vmem:[%s19 + $0x18] sm:$0xf]
    %v1620 = vld [vmem:[%s19 + $0x1c] sm:$0xf]
    %v1621 = vld [vmem:[%s19 + $0x20] sm:$0xf]
    %v1622 = vld [vmem:[%s19 + $0x24] sm:$0xf]
    %v1623 = vld [vmem:[%s19 + $0x28] sm:$0xf]
    %v1624 = vld [vmem:[%s19 + $0x2c] sm:$0xf]
    %v1625 = vld [vmem:[%s19 + $0x30] sm:$0xf]
    %v1626 = vld [vmem:[%s19 + $0x34] sm:$0xf]
    %v1627 = vld [vmem:[%s19 + $0x38] sm:$0xf]
    %v1628 = vld [vmem:[%s19 + $0x3c] sm:$0xf]
    %v1629 = vpack.c.bf16 %v1612, %v1611
    %v1630 = vld [vmem:[%s20] sm:$0x1]
    %v1632 = vperm.slane %v1630, 0
    %v1650 = vunpack.c.l.b16 %v1613
    %v1651 = vunpack.c.l.b16 %v1614
    %v1652 = vunpack.c.l.b16 %v1615
    %v1653 = vunpack.c.l.b16 %v1616
    %v1654 = vunpack.c.l.b16 %v1617
    %v1655 = vunpack.c.l.b16 %v1618
    %v1656 = vunpack.c.l.b16 %v1619
    %v1657 = vunpack.c.l.b16 %v1620
    %v1658 = vunpack.c.l.b16 %v1621
    %v1659 = vunpack.c.l.b16 %v1622
    %v1660 = vunpack.c.l.b16 %v1623
    %v1661 = vunpack.c.l.b16 %v1624
    %v1662 = vunpack.c.l.b16 %v1625
    %v1663 = vunpack.c.l.b16 %v1626
    %v1664 = vunpack.c.l.b16 %v1627
    %v1665 = vunpack.c.l.b16 %v1628
    %v1666 = vpack.c.b16 %v1651, %v1650
    %v1667 = vpack.c.b16 %v1653, %v1652
    %v1668 = vpack.c.b16 %v1655, %v1654
    %v1669 = vpack.c.b16 %v1657, %v1656
    %v1670 = vpack.c.b16 %v1659, %v1658
    %v1671 = vpack.c.b16 %v1661, %v1660
    %v1672 = vpack.c.b16 %v1663, %v1662
    %v1673 = vpack.c.b16 %v1665, %v1664
    %1682 = vmatpush.bf16.msra.mxu0 %v1673
    %1683 = vmatpush.bf16.msra.mxu0 %v1672
    %1684 = vmatpush.bf16.msra.mxu0 %v1671
    %1685 = vmatpush.bf16.msra.mxu0 %v1670
    %1686 = vmatpush.bf16.msra.mxu0 %v1669
    %1687 = vmatpush.bf16.msra.mxu0 %v1668
    %1688 = vmatpush.bf16.msra.mxu0 %v1667
    %1689 = vmatpush.bf16.msra.mxu0 %v1666
    %1690 = vmatmul.bf16.gmra.mxu0 %v1629
    %v1691 = vpop.f32.mrf.mxu0
    %v1692 = vadd.f32 %v1632, %v1691
    %v1693 = vpop.f32.mrf.mxu0
    %v1694 = vadd.f32 %v1632, %v1693
    %1695 = vdwg.mxu0
    %v1696 = vadd.f32 %v1692, %v1192
    %v1697 = vadd.f32 %v1694, %v1193
    %1698 = vst.msk [vmem:[#allocation15] sm:$0xff] %vm189, %v1696
    %1699 = vst.msk [vmem:[#allocation15 + $0x8] sm:$0xff] %vm189, %v1697
    // Predicated region
    $region114: #{tpu_custom_call.1} parent=1 // pred_check
      _
    $region115: #{tpu_custom_call.1} parent=1 // pred_check_branch
      %1701 = sbr.rel (0) target = $region117
    $region116: #{tpu_custom_call.1} parent=1 // pred_region
      %1703 = vsyncadd [#allocation4], 0
      %s1704 = sshll.u32 [#allocation14], 4
      %s1705 = int_to_ptr.vmem [resolvable:$true] %s1704
      %s1706 = sshll.u32 %s21, 4
      %s1707 = int_to_ptr.hbm [resolvable:$true] %s1706
      %1712 = dma.vmem_to_hbm [thread:$0]  %s1705, 256, %s1707, [#allocation4], 128, 128, 8
    $region117: #{tpu_custom_call.1} parent=1 // pred_fallthru
      _
    // Predicated region
    $region118: #{tpu_custom_call.1} parent=1 // pred_check
      _
    $region119: #{tpu_custom_call.1} parent=1 // pred_check_branch
      %1714 = sbr.rel (0) target = $region121
    $region120: #{tpu_custom_call.1} parent=1 // pred_region
      %1716 = vsyncadd [#allocation16], 0
      %s1717 = sshll.u32 [#allocation15], 4
      %s1718 = int_to_ptr.vmem [resolvable:$true] %s1717
      %s1719 = sshll.u32 %s22, 4
      %s1720 = int_to_ptr.hbm [resolvable:$true] %s1719
      %1725 = dma.vmem_to_hbm [thread:$0]  %s1718, 256, %s1720, [#allocation16], 128, 128, 8
    $region121: #{tpu_custom_call.1} parent=1 // pred_fallthru
      _
    // Predicated region
    $region122: #{tpu_custom_call.1} parent=1 // pred_check
      _
    $region123: #{tpu_custom_call.1} parent=1 // pred_check_branch
      %1727 = sbr.rel (0) target = $region125
    $region124: #{tpu_custom_call.1} parent=1 // pred_region
      %1729 = dma.done [#allocation4], 256
    $region125: #{tpu_custom_call.1} parent=1 // pred_fallthru
      _
    // Predicated region
    $region126: #{tpu_custom_call.1} parent=1 // pred_check
      _
    $region127: #{tpu_custom_call.1} parent=1 // pred_check_branch
      %1731 = sbr.rel (0) target = $region129
    $region128: #{tpu_custom_call.1} parent=1 // pred_region
      %1733 = dma.done [#allocation16], 256
    $region129: #{tpu_custom_call.1} parent=1 // pred_fallthru
      _
    %1734 = vsyncpa [#allocation3], 1
    %1735 = vsyncpa [#allocation6], 1
    %1736 = vsyncpa [#allocation9], 1
    %1737 = vsyncpa [#allocation12], 1
    %1738 = vsyncpa [#allocation4], 1
    %1739 = vsyncpa [#allocation16], 1

</llo_original>
